<compile_context>
chip_gen: v5e
topology: v5e:2x2
jax: 0.10.0
libtpu: 0.0.40
codegen_flags: <defaults>
</compile_context>

<pallas_src>
import functools
import math

import jax
import jax.numpy as jnp
from jax import lax
from jax.experimental import pallas as pl
from jax.experimental.pallas import tpu as pltpu

# ----------------------------- model dims (small) -----------------------------
B = 2          # batch
T = 8          # sequence length
D = 32         # hidden size
H = 4          # attention heads
HD = D // H    # head dim
I = 64         # MLP intermediate size
V = 128        # vocab size (lane-dense unembed output)
EPS = 1e-5


def _rms_scale(x):
    # x: (R, D) f32 -> x * rsqrt(mean(x^2)+eps)   (gamma folded into weights)
    return x * lax.rsqrt(jnp.mean(x * x, axis=-1, keepdims=True) + EPS)


# ------------------------------ fused kernel ------------------------------
def fused_block_kernel(x_ref, wqkv_ref, wo_ref, wgu_ref, wd_ref, wemb_ref,
                       *rest, has_add):
    if has_add:
        add_ref, blk_ref, lblk_ref, lattn_ref, linter_ref, lmlp_ref, ctx_sc = rest
    else:
        blk_ref, lblk_ref, lattn_ref, linter_ref, lmlp_ref, ctx_sc = rest

    x = x_ref[0]                                           # (T, D) f32

    # ---- input RMSNorm (gamma pre-folded) + fused QKV projection ----
    h = _rms_scale(x)
    qkv = jnp.dot(h.astype(jnp.bfloat16), wqkv_ref[...],
                  preferred_element_type=jnp.float32)      # (T, 3D) f32
    q, k, v = qkv[:, :D], qkv[:, D:2 * D], qkv[:, 2 * D:]  # q pre-scaled by 1/sqrt(HD)

    # ---- causal self-attention; additive mask hoisted out of head loop ----
    row = lax.broadcasted_iota(jnp.int32, (T, T), 0)
    col = lax.broadcasted_iota(jnp.int32, (T, T), 1)
    causal_bias = jnp.where(row >= col, 0.0, -1e30).astype(jnp.float32)

    for hi in range(H):                                    # static unrolled loop
        sl = slice(hi * HD, (hi + 1) * HD)
        qh = q[:, sl].astype(jnp.bfloat16)
        kh = k[:, sl].astype(jnp.bfloat16)
        vh = v[:, sl].astype(jnp.bfloat16)
        s = lax.dot_general(qh, kh, (((1,), (1,)), ((), ())),
                            preferred_element_type=jnp.float32) + causal_bias
        m = jnp.max(s, axis=-1, keepdims=True)
        p = jnp.exp(s - m)
        p = p * pl.reciprocal(jnp.sum(p, axis=-1, keepdims=True), approx=True)
        # write this head's context directly into its lane slice (no concat)
        ctx_sc[:, sl] = jnp.dot(p.astype(jnp.bfloat16), vh,
                                preferred_element_type=jnp.float32)

    # ---- output projection (+ optional AttnWrapper.add_tensor) ----
    attn_out = jnp.dot(ctx_sc[...].astype(jnp.bfloat16), wo_ref[...],
                       preferred_element_type=jnp.float32)
    if has_add:
        attn_out = attn_out + add_ref[0]

    # residual add (attn_output += args[0])
    inter = attn_out + x

    # ---- post-attn RMSNorm (gamma pre-folded) + SiLU-gated MLP ----
    h2 = _rms_scale(inter)
    gu = jnp.dot(h2.astype(jnp.bfloat16), wgu_ref[...],
                 preferred_element_type=jnp.float32)       # (T, 2I)=(8,128)
    gate, up = gu[:, :I], gu[:, I:]
    act = gate * jax.nn.sigmoid(gate) * up                 # SiLU(gate) * up, f32
    mlp_out = jnp.dot(act.astype(jnp.bfloat16), wd_ref[...],
                      preferred_element_type=jnp.float32)

    block_out = inter + mlp_out
    blk_ref[0] = block_out

    # ---- fused final RMSNorm (gamma pre-folded into unembed) + unembed ----
    # Stack the four (T, D) tensors into one (4T, D) slab -> one lane-dense
    # (4T, D) @ (D, V) matmul instead of four tiny ones.
    stacked = jnp.concatenate([
        _rms_scale(block_out),
        _rms_scale(attn_out),
        _rms_scale(inter),
        _rms_scale(mlp_out),
    ], axis=0)                                             # (4T, D)
    logits = jnp.dot(stacked.astype(jnp.bfloat16), wemb_ref[...],
                     preferred_element_type=jnp.float32)   # (4T, V)
    lblk_ref[0] = logits[0 * T:1 * T]
    lattn_ref[0] = logits[1 * T:2 * T]
    linter_ref[0] = logits[2 * T:3 * T]
    lmlp_ref[0] = logits[3 * T:4 * T]


# ------------------------------ wrapper ------------------------------
def _prep_params(params):
    """Host-side prep (once): fold gammas + attn scale into weights, fuse, cast.

    rmsnorm(x; g) @ W == (x * rsqrt(mean x^2 + eps)) @ (diag(g) @ W)
    """
    g1 = params["g1"].reshape(D, 1)
    g2 = params["g2"].reshape(D, 1)
    gn = params["g_norm"].reshape(D, 1)
    scale = 1.0 / math.sqrt(HD)
    wqkv = jnp.concatenate(
        [params["wq"] * scale, params["wk"], params["wv"]], axis=1)
    wgu = jnp.concatenate([params["wg"], params["wu"]], axis=1)
    return dict(
        wqkv=(g1 * wqkv).astype(jnp.bfloat16),             # (D, 3D)
        wo=params["wo"].astype(jnp.bfloat16),               # (D, D)
        wgu=(g2 * wgu).astype(jnp.bfloat16),                # (D, 2I) lane-dense
        wd=params["wd"].astype(jnp.bfloat16),               # (I, D)
        w_unembed=(gn * params["w_unembed"]).astype(jnp.bfloat16),  # (D, V)
    )


def block_output_wrapper_forward(x, params, add_tensor=None):
    p = _prep_params(params)
    has_add = add_tensor is not None

    full = lambda shape: pl.BlockSpec(shape, lambda b: tuple(0 for _ in shape))
    per_b = lambda shape: pl.BlockSpec((1,) + shape, lambda b: (b, 0, 0))

    in_specs = [
        per_b((T, D)),        # x
        full((D, 3 * D)),     # fused Wqkv  (g1 + 1/sqrt(HD) folded)
        full((D, D)),         # Wo
        full((D, 2 * I)),     # fused W_gate|W_up (g2 folded; lane-dense 128)
        full((I, D)),         # W_down
        full((D, V)),         # unembed matrix (g_norm folded; lane-dense 128)
    ]
    args = [x, p["wqkv"], p["wo"], p["wgu"], p["wd"], p["w_unembed"]]
    if has_add:
        in_specs.append(per_b((T, D)))
        args.append(add_tensor)

    flops_per_b = (2 * T * D * 3 * D            # qkv
                   + H * (2 * T * T * HD * 2)   # attention
                   + 2 * T * D * D              # wo
                   + 2 * T * D * 2 * I          # gate/up
                   + 2 * T * I * D              # down
                   + 2 * (4 * T) * D * V)       # fused unembed
    weight_bytes = 2 * (D * 3 * D + D * D + D * 2 * I + I * D + D * V)
    cost = pl.CostEstimate(
        flops=B * flops_per_b,
        transcendentals=B * (H * T * T + T * I + 6 * T),
        bytes_accessed=B * (T * D * 4 * (2 + int(has_add)) + 4 * T * V * 4)
        + weight_bytes,
    )

    outs = pl.pallas_call(
        functools.partial(fused_block_kernel, has_add=has_add),
        out_shape=[jax.ShapeDtypeStruct((B, T, D), jnp.float32)]
        + [jax.ShapeDtypeStruct((B, T, V), jnp.float32)] * 4,
        grid=(B,),
        in_specs=in_specs,
        out_specs=[per_b((T, D))] + [per_b((T, V))] * 4,
        scratch_shapes=[pltpu.VMEM((T, D), jnp.float32)],   # per-head ctx slab
        compiler_params=pltpu.CompilerParams(
            dimension_semantics=("parallel",)),              # both TCs on v7x
        cost_estimate=cost,
    )(*args)

    block_out, l_blk, l_attn, l_inter, l_mlp = outs
    return {
        "block_output": block_out,
        "block_output_unembedded": l_blk,
        "attn_mech_output_unembedded": l_attn,
        "intermediate_res_unembedded": l_inter,
        "mlp_output_unembedded": l_mlp,
    }


# ------------------------------ pure-JAX reference ------------------------------
def _ref_rms(x, g):
    return x * lax.rsqrt(jnp.mean(x * x, -1, keepdims=True) + EPS) * g


def reference_forward(x, params, add_tensor=None):
    hp = lax.Precision.HIGHEST
    h = _ref_rms(x, params["g1"])
    q = jnp.einsum("btd,de->bte", h, params["wq"], precision=hp)
    k = jnp.einsum("btd,de->bte", h, params["wk"], precision=hp)
    v = jnp.einsum("btd,de->bte", h, params["wv"], precision=hp)
    rs = lambda a: a.reshape(B, T, H, HD).transpose(0, 2, 1, 3)
    q, k, v = rs(q), rs(k), rs(v)
    s = jnp.einsum("bhqd,bhkd->bhqk", q, k, precision=hp) / math.sqrt(HD)
    mask = jnp.tril(jnp.ones((T, T), bool))
    s = jnp.where(mask, s, -1e30)
    p = jax.nn.softmax(s, axis=-1)
    ctx = jnp.einsum("bhqk,bhkd->bhqd", p, v, precision=hp)
    ctx = ctx.transpose(0, 2, 1, 3).reshape(B, T, D)
    attn = jnp.einsum("btd,de->bte", ctx, params["wo"], precision=hp)
    if add_tensor is not None:
        attn = attn + add_tensor
    inter = attn + x
    h2 = _ref_rms(inter, params["g2"])
    gate = jnp.einsum("btd,di->bti", h2, params["wg"], precision=hp)
    up = jnp.einsum("btd,di->bti", h2, params["wu"], precision=hp)
    mlp = jnp.einsum("bti,id->btd", jax.nn.silu(gate) * up, params["wd"], precision=hp)
    out = inter + mlp
    unemb = lambda t: jnp.einsum(
        "btd,dv->btv", _ref_rms(t, params["g_norm"]), params["w_unembed"], precision=hp)
    return {
        "block_output": out,
        "block_output_unembedded": unemb(out),
        "attn_mech_output_unembedded": unemb(attn),
        "intermediate_res_unembedded": unemb(inter),
        "mlp_output_unembedded": unemb(mlp),
    }


# ------------------------------ main ------------------------------
if __name__ == "__main__":
    key = jax.random.PRNGKey(0)
    ks = jax.random.split(key, 13)
    n = lambda k, shape, s=0.02: jax.random.normal(k, shape, jnp.float32) * s

    params = {
        "g1": 1.0 + n(ks[10], (1, D), 0.05),
        "wq": n(ks[0], (D, D)),
        "wk": n(ks[1], (D, D)),
        "wv": n(ks[2], (D, D)),
        "wo": n(ks[3], (D, D)),
        "g2": 1.0 + n(ks[11], (1, D), 0.05),
        "wg": n(ks[4], (D, I)),
        "wu": n(ks[5], (D, I)),
        "wd": n(ks[6], (I, D)),
        "g_norm": 1.0 + n(ks[12], (1, D), 0.05),
        "w_unembed": n(ks[7], (D, V)),
    }
    x = jax.random.normal(ks[8], (B, T, D), jnp.float32)

    # Common path: AttnWrapper.add_tensor is None (no zeros DMA / add compiled in).
    out = block_output_wrapper_forward(x, params, add_tensor=None)
    jax.block_until_ready(out)
    ref = reference_forward(x, params, None)
    for name in out:
        assert out[name].shape == ref[name].shape, name
        assert jnp.allclose(out[name], ref[name], atol=1e-2, rtol=1e-2), name

    # add_tensor path (AttnWrapper.add_tensor set via attn_add_tensor()).
    add_t = n(ks[9], (B, T, D), 0.1)
    out2 = block_output_wrapper_forward(x, params, add_tensor=add_t)
    jax.block_until_ready(out2)
    ref2 = reference_forward(x, params, add_t)
    for name in out2:
        assert out2[name].shape == ref2[name].shape, name
        assert jnp.allclose(out2[name], ref2[name], atol=1e-2, rtol=1e-2), name

    print("KERNEL_OK")
</pallas_src>

<mosaic_0001>
module attributes {stable_mosaic.version = 11 : i64} {
  func.func @fused_block_kernel(%arg0: i32, %arg1: memref<1x8x32xf32, #tpu.memory_space<vmem>>, %arg2: memref<32x96xbf16, #tpu.memory_space<vmem>>, %arg3: memref<32x32xbf16, #tpu.memory_space<vmem>>, %arg4: memref<32x128xbf16, #tpu.memory_space<vmem>>, %arg5: memref<64x32xbf16, #tpu.memory_space<vmem>>, %arg6: memref<32x128xbf16, #tpu.memory_space<vmem>>, %arg7: memref<1x8x32xf32, #tpu.memory_space<vmem>>, %arg8: memref<1x8x128xf32, #tpu.memory_space<vmem>>, %arg9: memref<1x8x128xf32, #tpu.memory_space<vmem>>, %arg10: memref<1x8x128xf32, #tpu.memory_space<vmem>>, %arg11: memref<1x8x128xf32, #tpu.memory_space<vmem>>, %arg12: memref<8x32xf32, #tpu.memory_space<vmem>>) attributes {dimension_semantics = [#tpu.dimension_semantics<parallel>], iteration_bounds = array<i64: 2>, scalar_prefetch = 0 : i64, scratch_operands = 1 : i64, tpu.core_type = #tpu.core_type<tc>, window_params = [{transform_indices = @transform_0, window_bounds = array<i64: 1, 8, 32>}, {pipeline_mode = #tpu.pipeline_mode<synchronous>, transform_indices = @transform_1, window_bounds = array<i64: 32, 96>}, {pipeline_mode = #tpu.pipeline_mode<synchronous>, transform_indices = @transform_2, window_bounds = array<i64: 32, 32>}, {pipeline_mode = #tpu.pipeline_mode<synchronous>, transform_indices = @transform_3, window_bounds = array<i64: 32, 128>}, {pipeline_mode = #tpu.pipeline_mode<synchronous>, transform_indices = @transform_4, window_bounds = array<i64: 64, 32>}, {pipeline_mode = #tpu.pipeline_mode<synchronous>, transform_indices = @transform_5, window_bounds = array<i64: 32, 128>}, {transform_indices = @transform_6, window_bounds = array<i64: 1, 8, 32>}, {transform_indices = @transform_7, window_bounds = array<i64: 1, 8, 128>}, {transform_indices = @transform_8, window_bounds = array<i64: 1, 8, 128>}, {transform_indices = @transform_9, window_bounds = array<i64: 1, 8, 128>}, {transform_indices = @transform_10, window_bounds = array<i64: 1, 8, 128>}]} {
    %c0 = arith.constant 0 : index
    %c0_0 = arith.constant 0 : index
    %c0_1 = arith.constant 0 : index
    %0 = vector.load %arg1[%c0, %c0_0, %c0_1] : memref<1x8x32xf32, #tpu.memory_space<vmem>>, vector<1x8x32xf32>
    %1 = vector.shape_cast %0 : vector<1x8x32xf32> to vector<8x32xf32>
    %2 = arith.mulf %1, %1 : vector<8x32xf32>
    %cst = arith.constant dense<0.000000e+00> : vector<8xf32>
    %3 = vector.multi_reduction <add>, %2, %cst [1] : vector<8x32xf32> to vector<8xf32>
    %4 = vector.shape_cast %3 : vector<8xf32> to vector<8x1xf32>
    %cst_2 = arith.constant 3.200000e+01 : f32
    %5 = vector.broadcast %cst_2 : f32 to vector<8x1xf32>
    %6 = arith.divf %4, %5 : vector<8x1xf32>
    %cst_3 = arith.constant 9.99999974E-6 : f32
    %7 = vector.broadcast %cst_3 : f32 to vector<8x1xf32>
    %8 = arith.addf %6, %7 : vector<8x1xf32>
    %9 = math.rsqrt %8 : vector<8x1xf32>
    %10 = vector.broadcast %9 : vector<8x1xf32> to vector<8x32xf32>
    %11 = arith.mulf %1, %10 : vector<8x32xf32>
    %12 = arith.truncf %11 : vector<8x32xf32> to vector<8x32xbf16>
    %c0_4 = arith.constant 0 : index
    %c0_5 = arith.constant 0 : index
    %13 = vector.load %arg2[%c0_4, %c0_5] : memref<32x96xbf16, #tpu.memory_space<vmem>>, vector<32x96xbf16>
    %cst_6 = arith.constant dense<0.000000e+00> : vector<8x96xf32>
    %14 = tpu.matmul %12, %13, %cst_6 {dimension_numbers = #tpu.dot_dimension_numbers<[1], [0], [0], [1], [0, 0, 1, 1], [], []>} : vector<8x32xbf16>, vector<32x96xbf16>, vector<8x96xf32> -> vector<8x96xf32>
    %15 = vector.extract_strided_slice %14 {offsets = [0, 0], sizes = [8, 32], strides = [1, 1]} : vector<8x96xf32> to vector<8x32xf32>
    %16 = vector.extract_strided_slice %14 {offsets = [0, 32], sizes = [8, 32], strides = [1, 1]} : vector<8x96xf32> to vector<8x32xf32>
    %17 = vector.extract_strided_slice %14 {offsets = [0, 64], sizes = [8, 32], strides = [1, 1]} : vector<8x96xf32> to vector<8x32xf32>
    %18 = tpu.iota {dimensions = array<i32: 0>} : vector<8x8xi32>
    %19 = tpu.iota {dimensions = array<i32: 1>} : vector<8x8xi32>
    %20 = arith.cmpi sge, %18, %19 : vector<8x8xi32>
    %cst_7 = arith.constant 0.000000e+00 : f32
    %cst_8 = arith.constant -1.000000e+30 : f32
    %21 = vector.broadcast %cst_7 : f32 to vector<8x8xf32>
    %22 = vector.broadcast %cst_8 : f32 to vector<8x8xf32>
    %23 = arith.select %20, %21, %22 : vector<8x8xi1>, vector<8x8xf32>
    %24 = vector.extract_strided_slice %15 {offsets = [0, 0], sizes = [8, 8], strides = [1, 1]} : vector<8x32xf32> to vector<8x8xf32>
    %25 = arith.truncf %24 : vector<8x8xf32> to vector<8x8xbf16>
    %26 = vector.extract_strided_slice %16 {offsets = [0, 0], sizes = [8, 8], strides = [1, 1]} : vector<8x32xf32> to vector<8x8xf32>
    %27 = arith.truncf %26 : vector<8x8xf32> to vector<8x8xbf16>
    %28 = vector.extract_strided_slice %17 {offsets = [0, 0], sizes = [8, 8], strides = [1, 1]} : vector<8x32xf32> to vector<8x8xf32>
    %29 = arith.truncf %28 : vector<8x8xf32> to vector<8x8xbf16>
    %cst_9 = arith.constant dense<0.000000e+00> : vector<8x8xf32>
    %30 = tpu.matmul %25, %27, %cst_9 {dimension_numbers = #tpu.dot_dimension_numbers<[1], [1], [0], [0], [0, 0, 1, 0], [], []>} : vector<8x8xbf16>, vector<8x8xbf16>, vector<8x8xf32> -> vector<8x8xf32>
    %31 = arith.addf %30, %23 : vector<8x8xf32>
    %cst_10 = arith.constant dense<0xFF800000> : vector<8xf32>
    %32 = vector.multi_reduction <maximumf>, %31, %cst_10 [1] : vector<8x8xf32> to vector<8xf32>
    %33 = vector.shape_cast %32 : vector<8xf32> to vector<8x1xf32>
    %34 = vector.broadcast %33 : vector<8x1xf32> to vector<8x8xf32>
    %35 = arith.subf %31, %34 : vector<8x8xf32>
    %36 = math.exp %35 : vector<8x8xf32>
    %cst_11 = arith.constant dense<0.000000e+00> : vector<8xf32>
    %37 = vector.multi_reduction <add>, %36, %cst_11 [1] : vector<8x8xf32> to vector<8xf32>
    %38 = vector.shape_cast %37 : vector<8xf32> to vector<8x1xf32>
    %39 = tpu.reciprocal %38 {approx = true} : vector<8x1xf32> -> vector<8x1xf32>
    %40 = vector.broadcast %39 : vector<8x1xf32> to vector<8x8xf32>
    %41 = arith.mulf %36, %40 : vector<8x8xf32>
    %42 = arith.truncf %41 : vector<8x8xf32> to vector<8x8xbf16>
    %cst_12 = arith.constant dense<0.000000e+00> : vector<8x8xf32>
    %43 = tpu.matmul %42, %29, %cst_12 {dimension_numbers = #tpu.dot_dimension_numbers<[1], [0], [0], [1], [0, 0, 1, 1], [], []>} : vector<8x8xbf16>, vector<8x8xbf16>, vector<8x8xf32> -> vector<8x8xf32>
    %c0_13 = arith.constant 0 : index
    %c0_14 = arith.constant 0 : index
    %44 = vector.load %arg12[%c0_13, %c0_14] : memref<8x32xf32, #tpu.memory_space<vmem>>, vector<8x8xf32>
    tpu.vector_store %arg12[%c0_13, %c0_14], %43 {strides = array<i32>} : memref<8x32xf32, #tpu.memory_space<vmem>>, vector<8x8xf32>,
    %45 = vector.extract_strided_slice %15 {offsets = [0, 8], sizes = [8, 8], strides = [1, 1]} : vector<8x32xf32> to vector<8x8xf32>
    %46 = arith.truncf %45 : vector<8x8xf32> to vector<8x8xbf16>
    %47 = vector.extract_strided_slice %16 {offsets = [0, 8], sizes = [8, 8], strides = [1, 1]} : vector<8x32xf32> to vector<8x8xf32>
    %48 = arith.truncf %47 : vector<8x8xf32> to vector<8x8xbf16>
    %49 = vector.extract_strided_slice %17 {offsets = [0, 8], sizes = [8, 8], strides = [1, 1]} : vector<8x32xf32> to vector<8x8xf32>
    %50 = arith.truncf %49 : vector<8x8xf32> to vector<8x8xbf16>
    %cst_15 = arith.constant dense<0.000000e+00> : vector<8x8xf32>
    %51 = tpu.matmul %46, %48, %cst_15 {dimension_numbers = #tpu.dot_dimension_numbers<[1], [1], [0], [0], [0, 0, 1, 0], [], []>} : vector<8x8xbf16>, vector<8x8xbf16>, vector<8x8xf32> -> vector<8x8xf32>
    %52 = arith.addf %51, %23 : vector<8x8xf32>
    %cst_16 = arith.constant dense<0xFF800000> : vector<8xf32>
    %53 = vector.multi_reduction <maximumf>, %52, %cst_16 [1] : vector<8x8xf32> to vector<8xf32>
    %54 = vector.shape_cast %53 : vector<8xf32> to vector<8x1xf32>
    %55 = vector.broadcast %54 : vector<8x1xf32> to vector<8x8xf32>
    %56 = arith.subf %52, %55 : vector<8x8xf32>
    %57 = math.exp %56 : vector<8x8xf32>
    %cst_17 = arith.constant dense<0.000000e+00> : vector<8xf32>
    %58 = vector.multi_reduction <add>, %57, %cst_17 [1] : vector<8x8xf32> to vector<8xf32>
    %59 = vector.shape_cast %58 : vector<8xf32> to vector<8x1xf32>
    %60 = tpu.reciprocal %59 {approx = true} : vector<8x1xf32> -> vector<8x1xf32>
    %61 = vector.broadcast %60 : vector<8x1xf32> to vector<8x8xf32>
    %62 = arith.mulf %57, %61 : vector<8x8xf32>
    %63 = arith.truncf %62 : vector<8x8xf32> to vector<8x8xbf16>
    %cst_18 = arith.constant dense<0.000000e+00> : vector<8x8xf32>
    %64 = tpu.matmul %63, %50, %cst_18 {dimension_numbers = #tpu.dot_dimension_numbers<[1], [0], [0], [1], [0, 0, 1, 1], [], []>} : vector<8x8xbf16>, vector<8x8xbf16>, vector<8x8xf32> -> vector<8x8xf32>
    %c0_19 = arith.constant 0 : index
    %c8 = arith.constant 8 : index
    %65 = vector.load %arg12[%c0_19, %c8] : memref<8x32xf32, #tpu.memory_space<vmem>>, vector<8x8xf32>
    tpu.vector_store %arg12[%c0_19, %c8], %64 {strides = array<i32>} : memref<8x32xf32, #tpu.memory_space<vmem>>, vector<8x8xf32>,
    %66 = vector.extract_strided_slice %15 {offsets = [0, 16], sizes = [8, 8], strides = [1, 1]} : vector<8x32xf32> to vector<8x8xf32>
    %67 = arith.truncf %66 : vector<8x8xf32> to vector<8x8xbf16>
    %68 = vector.extract_strided_slice %16 {offsets = [0, 16], sizes = [8, 8], strides = [1, 1]} : vector<8x32xf32> to vector<8x8xf32>
    %69 = arith.truncf %68 : vector<8x8xf32> to vector<8x8xbf16>
    %70 = vector.extract_strided_slice %17 {offsets = [0, 16], sizes = [8, 8], strides = [1, 1]} : vector<8x32xf32> to vector<8x8xf32>
    %71 = arith.truncf %70 : vector<8x8xf32> to vector<8x8xbf16>
    %cst_20 = arith.constant dense<0.000000e+00> : vector<8x8xf32>
    %72 = tpu.matmul %67, %69, %cst_20 {dimension_numbers = #tpu.dot_dimension_numbers<[1], [1], [0], [0], [0, 0, 1, 0], [], []>} : vector<8x8xbf16>, vector<8x8xbf16>, vector<8x8xf32> -> vector<8x8xf32>
    %73 = arith.addf %72, %23 : vector<8x8xf32>
    %cst_21 = arith.constant dense<0xFF800000> : vector<8xf32>
    %74 = vector.multi_reduction <maximumf>, %73, %cst_21 [1] : vector<8x8xf32> to vector<8xf32>
    %75 = vector.shape_cast %74 : vector<8xf32> to vector<8x1xf32>
    %76 = vector.broadcast %75 : vector<8x1xf32> to vector<8x8xf32>
    %77 = arith.subf %73, %76 : vector<8x8xf32>
    %78 = math.exp %77 : vector<8x8xf32>
    %cst_22 = arith.constant dense<0.000000e+00> : vector<8xf32>
    %79 = vector.multi_reduction <add>, %78, %cst_22 [1] : vector<8x8xf32> to vector<8xf32>
    %80 = vector.shape_cast %79 : vector<8xf32> to vector<8x1xf32>
    %81 = tpu.reciprocal %80 {approx = true} : vector<8x1xf32> -> vector<8x1xf32>
    %82 = vector.broadcast %81 : vector<8x1xf32> to vector<8x8xf32>
    %83 = arith.mulf %78, %82 : vector<8x8xf32>
    %84 = arith.truncf %83 : vector<8x8xf32> to vector<8x8xbf16>
    %cst_23 = arith.constant dense<0.000000e+00> : vector<8x8xf32>
    %85 = tpu.matmul %84, %71, %cst_23 {dimension_numbers = #tpu.dot_dimension_numbers<[1], [0], [0], [1], [0, 0, 1, 1], [], []>} : vector<8x8xbf16>, vector<8x8xbf16>, vector<8x8xf32> -> vector<8x8xf32>
    %c0_24 = arith.constant 0 : index
    %c16 = arith.constant 16 : index
    %86 = vector.load %arg12[%c0_24, %c16] : memref<8x32xf32, #tpu.memory_space<vmem>>, vector<8x8xf32>
    tpu.vector_store %arg12[%c0_24, %c16], %85 {strides = array<i32>} : memref<8x32xf32, #tpu.memory_space<vmem>>, vector<8x8xf32>,
    %87 = vector.extract_strided_slice %15 {offsets = [0, 24], sizes = [8, 8], strides = [1, 1]} : vector<8x32xf32> to vector<8x8xf32>
    %88 = arith.truncf %87 : vector<8x8xf32> to vector<8x8xbf16>
    %89 = vector.extract_strided_slice %16 {offsets = [0, 24], sizes = [8, 8], strides = [1, 1]} : vector<8x32xf32> to vector<8x8xf32>
    %90 = arith.truncf %89 : vector<8x8xf32> to vector<8x8xbf16>
    %91 = vector.extract_strided_slice %17 {offsets = [0, 24], sizes = [8, 8], strides = [1, 1]} : vector<8x32xf32> to vector<8x8xf32>
    %92 = arith.truncf %91 : vector<8x8xf32> to vector<8x8xbf16>
    %cst_25 = arith.constant dense<0.000000e+00> : vector<8x8xf32>
    %93 = tpu.matmul %88, %90, %cst_25 {dimension_numbers = #tpu.dot_dimension_numbers<[1], [1], [0], [0], [0, 0, 1, 0], [], []>} : vector<8x8xbf16>, vector<8x8xbf16>, vector<8x8xf32> -> vector<8x8xf32>
    %94 = arith.addf %93, %23 : vector<8x8xf32>
    %cst_26 = arith.constant dense<0xFF800000> : vector<8xf32>
    %95 = vector.multi_reduction <maximumf>, %94, %cst_26 [1] : vector<8x8xf32> to vector<8xf32>
    %96 = vector.shape_cast %95 : vector<8xf32> to vector<8x1xf32>
    %97 = vector.broadcast %96 : vector<8x1xf32> to vector<8x8xf32>
    %98 = arith.subf %94, %97 : vector<8x8xf32>
    %99 = math.exp %98 : vector<8x8xf32>
    %cst_27 = arith.constant dense<0.000000e+00> : vector<8xf32>
    %100 = vector.multi_reduction <add>, %99, %cst_27 [1] : vector<8x8xf32> to vector<8xf32>
    %101 = vector.shape_cast %100 : vector<8xf32> to vector<8x1xf32>
    %102 = tpu.reciprocal %101 {approx = true} : vector<8x1xf32> -> vector<8x1xf32>
    %103 = vector.broadcast %102 : vector<8x1xf32> to vector<8x8xf32>
    %104 = arith.mulf %99, %103 : vector<8x8xf32>
    %105 = arith.truncf %104 : vector<8x8xf32> to vector<8x8xbf16>
    %cst_28 = arith.constant dense<0.000000e+00> : vector<8x8xf32>
    %106 = tpu.matmul %105, %92, %cst_28 {dimension_numbers = #tpu.dot_dimension_numbers<[1], [0], [0], [1], [0, 0, 1, 1], [], []>} : vector<8x8xbf16>, vector<8x8xbf16>, vector<8x8xf32> -> vector<8x8xf32>
    %c0_29 = arith.constant 0 : index
    %c24 = arith.constant 24 : index
    %107 = vector.load %arg12[%c0_29, %c24] : memref<8x32xf32, #tpu.memory_space<vmem>>, vector<8x8xf32>
    tpu.vector_store %arg12[%c0_29, %c24], %106 {strides = array<i32>} : memref<8x32xf32, #tpu.memory_space<vmem>>, vector<8x8xf32>,
    %c0_30 = arith.constant 0 : index
    %c0_31 = arith.constant 0 : index
    %108 = vector.load %arg12[%c0_30, %c0_31] : memref<8x32xf32, #tpu.memory_space<vmem>>, vector<8x32xf32>
    %109 = arith.truncf %108 : vector<8x32xf32> to vector<8x32xbf16>
    %c0_32 = arith.constant 0 : index
    %c0_33 = arith.constant 0 : index
    %110 = vector.load %arg3[%c0_32, %c0_33] : memref<32x32xbf16, #tpu.memory_space<vmem>>, vector<32x32xbf16>
    %cst_34 = arith.constant dense<0.000000e+00> : vector<8x32xf32>
    %111 = tpu.matmul %109, %110, %cst_34 {dimension_numbers = #tpu.dot_dimension_numbers<[1], [0], [0], [1], [0, 0, 1, 1], [], []>} : vector<8x32xbf16>, vector<32x32xbf16>, vector<8x32xf32> -> vector<8x32xf32>
    %112 = arith.addf %111, %1 : vector<8x32xf32>
    %113 = arith.mulf %112, %112 : vector<8x32xf32>
    %cst_35 = arith.constant dense<0.000000e+00> : vector<8xf32>
    %114 = vector.multi_reduction <add>, %113, %cst_35 [1] : vector<8x32xf32> to vector<8xf32>
    %115 = vector.shape_cast %114 : vector<8xf32> to vector<8x1xf32>
    %cst_36 = arith.constant 3.200000e+01 : f32
    %116 = vector.broadcast %cst_36 : f32 to vector<8x1xf32>
    %117 = arith.divf %115, %116 : vector<8x1xf32>
    %cst_37 = arith.constant 9.99999974E-6 : f32
    %118 = vector.broadcast %cst_37 : f32 to vector<8x1xf32>
    %119 = arith.addf %117, %118 : vector<8x1xf32>
    %120 = math.rsqrt %119 : vector<8x1xf32>
    %121 = vector.broadcast %120 : vector<8x1xf32> to vector<8x32xf32>
    %122 = arith.mulf %112, %121 : vector<8x32xf32>
    %123 = arith.truncf %122 : vector<8x32xf32> to vector<8x32xbf16>
    %c0_38 = arith.constant 0 : index
    %c0_39 = arith.constant 0 : index
    %124 = vector.load %arg4[%c0_38, %c0_39] : memref<32x128xbf16, #tpu.memory_space<vmem>>, vector<32x128xbf16>
    %cst_40 = arith.constant dense<0.000000e+00> : vector<8x128xf32>
    %125 = tpu.matmul %123, %124, %cst_40 {dimension_numbers = #tpu.dot_dimension_numbers<[1], [0], [0], [1], [0, 0, 1, 1], [], []>} : vector<8x32xbf16>, vector<32x128xbf16>, vector<8x128xf32> -> vector<8x128xf32>
    %126 = vector.extract_strided_slice %125 {offsets = [0, 0], sizes = [8, 64], strides = [1, 1]} : vector<8x128xf32> to vector<8x64xf32>
    %127 = vector.extract_strided_slice %125 {offsets = [0, 64], sizes = [8, 64], strides = [1, 1]} : vector<8x128xf32> to vector<8x64xf32>
    %128 = arith.negf %126 : vector<8x64xf32>
    %129 = math.exp %128 : vector<8x64xf32>
    %cst_41 = arith.constant 1.000000e+00 : f32
    %130 = vector.broadcast %cst_41 : f32 to vector<8x64xf32>
    %131 = arith.addf %130, %129 : vector<8x64xf32>
    %132 = arith.divf %130, %131 : vector<8x64xf32>
    %133 = arith.mulf %126, %132 : vector<8x64xf32>
    %134 = arith.mulf %133, %127 : vector<8x64xf32>
    %135 = arith.truncf %134 : vector<8x64xf32> to vector<8x64xbf16>
    %c0_42 = arith.constant 0 : index
    %c0_43 = arith.constant 0 : index
    %136 = vector.load %arg5[%c0_42, %c0_43] : memref<64x32xbf16, #tpu.memory_space<vmem>>, vector<64x32xbf16>
    %cst_44 = arith.constant dense<0.000000e+00> : vector<8x32xf32>
    %137 = tpu.matmul %135, %136, %cst_44 {dimension_numbers = #tpu.dot_dimension_numbers<[1], [0], [0], [1], [0, 0, 1, 1], [], []>} : vector<8x64xbf16>, vector<64x32xbf16>, vector<8x32xf32> -> vector<8x32xf32>
    %138 = arith.addf %112, %137 : vector<8x32xf32>
    %c0_45 = arith.constant 0 : index
    %c0_46 = arith.constant 0 : index
    %c0_47 = arith.constant 0 : index
    %139 = vector.load %arg7[%c0_45, %c0_46, %c0_47] : memref<1x8x32xf32, #tpu.memory_space<vmem>>, vector<1x8x32xf32>
    %140 = vector.shape_cast %139 : vector<1x8x32xf32> to vector<8x32xf32>
    %141 = vector.shape_cast %138 : vector<8x32xf32> to vector<1x8x32xf32>
    tpu.vector_store %arg7[%c0_45, %c0_46, %c0_47], %141 {strides = array<i32>} : memref<1x8x32xf32, #tpu.memory_space<vmem>>, vector<1x8x32xf32>,
    %142 = arith.mulf %138, %138 : vector<8x32xf32>
    %cst_48 = arith.constant dense<0.000000e+00> : vector<8xf32>
    %143 = vector.multi_reduction <add>, %142, %cst_48 [1] : vector<8x32xf32> to vector<8xf32>
    %144 = vector.shape_cast %143 : vector<8xf32> to vector<8x1xf32>
    %cst_49 = arith.constant 3.200000e+01 : f32
    %145 = vector.broadcast %cst_49 : f32 to vector<8x1xf32>
    %146 = arith.divf %144, %145 : vector<8x1xf32>
    %cst_50 = arith.constant 9.99999974E-6 : f32
    %147 = vector.broadcast %cst_50 : f32 to vector<8x1xf32>
    %148 = arith.addf %146, %147 : vector<8x1xf32>
    %149 = math.rsqrt %148 : vector<8x1xf32>
    %150 = vector.broadcast %149 : vector<8x1xf32> to vector<8x32xf32>
    %151 = arith.mulf %138, %150 : vector<8x32xf32>
    %152 = arith.mulf %111, %111 : vector<8x32xf32>
    %cst_51 = arith.constant dense<0.000000e+00> : vector<8xf32>
    %153 = vector.multi_reduction <add>, %152, %cst_51 [1] : vector<8x32xf32> to vector<8xf32>
    %154 = vector.shape_cast %153 : vector<8xf32> to vector<8x1xf32>
    %cst_52 = arith.constant 3.200000e+01 : f32
    %155 = vector.broadcast %cst_52 : f32 to vector<8x1xf32>
    %156 = arith.divf %154, %155 : vector<8x1xf32>
    %cst_53 = arith.constant 9.99999974E-6 : f32
    %157 = vector.broadcast %cst_53 : f32 to vector<8x1xf32>
    %158 = arith.addf %156, %157 : vector<8x1xf32>
    %159 = math.rsqrt %158 : vector<8x1xf32>
    %160 = vector.broadcast %159 : vector<8x1xf32> to vector<8x32xf32>
    %161 = arith.mulf %111, %160 : vector<8x32xf32>
    %162 = arith.mulf %112, %112 : vector<8x32xf32>
    %cst_54 = arith.constant dense<0.000000e+00> : vector<8xf32>
    %163 = vector.multi_reduction <add>, %162, %cst_54 [1] : vector<8x32xf32> to vector<8xf32>
    %164 = vector.shape_cast %163 : vector<8xf32> to vector<8x1xf32>
    %cst_55 = arith.constant 3.200000e+01 : f32
    %165 = vector.broadcast %cst_55 : f32 to vector<8x1xf32>
    %166 = arith.divf %164, %165 : vector<8x1xf32>
    %cst_56 = arith.constant 9.99999974E-6 : f32
    %167 = vector.broadcast %cst_56 : f32 to vector<8x1xf32>
    %168 = arith.addf %166, %167 : vector<8x1xf32>
    %169 = math.rsqrt %168 : vector<8x1xf32>
    %170 = vector.broadcast %169 : vector<8x1xf32> to vector<8x32xf32>
    %171 = arith.mulf %112, %170 : vector<8x32xf32>
    %172 = arith.mulf %137, %137 : vector<8x32xf32>
    %cst_57 = arith.constant dense<0.000000e+00> : vector<8xf32>
    %173 = vector.multi_reduction <add>, %172, %cst_57 [1] : vector<8x32xf32> to vector<8xf32>
    %174 = vector.shape_cast %173 : vector<8xf32> to vector<8x1xf32>
    %cst_58 = arith.constant 3.200000e+01 : f32
    %175 = vector.broadcast %cst_58 : f32 to vector<8x1xf32>
    %176 = arith.divf %174, %175 : vector<8x1xf32>
    %cst_59 = arith.constant 9.99999974E-6 : f32
    %177 = vector.broadcast %cst_59 : f32 to vector<8x1xf32>
    %178 = arith.addf %176, %177 : vector<8x1xf32>
    %179 = math.rsqrt %178 : vector<8x1xf32>
    %180 = vector.broadcast %179 : vector<8x1xf32> to vector<8x32xf32>
    %181 = arith.mulf %137, %180 : vector<8x32xf32>
    %182 = tpu.concatenate %151, %161, %171, %181 in 0 : vector<8x32xf32>, vector<8x32xf32>, vector<8x32xf32>, vector<8x32xf32> -> vector<32x32xf32>
    %183 = arith.truncf %182 : vector<32x32xf32> to vector<32x32xbf16>
    %c0_60 = arith.constant 0 : index
    %c0_61 = arith.constant 0 : index
    %184 = vector.load %arg6[%c0_60, %c0_61] : memref<32x128xbf16, #tpu.memory_space<vmem>>, vector<32x128xbf16>
    %cst_62 = arith.constant dense<0.000000e+00> : vector<32x128xf32>
    %185 = tpu.matmul %183, %184, %cst_62 {dimension_numbers = #tpu.dot_dimension_numbers<[1], [0], [0], [1], [0, 0, 1, 1], [], []>} : vector<32x32xbf16>, vector<32x128xbf16>, vector<32x128xf32> -> vector<32x128xf32>
    %186 = vector.extract_strided_slice %185 {offsets = [0, 0], sizes = [8, 128], strides = [1, 1]} : vector<32x128xf32> to vector<8x128xf32>
    %c0_63 = arith.constant 0 : index
    %c0_64 = arith.constant 0 : index
    %c0_65 = arith.constant 0 : index
    %187 = vector.load %arg8[%c0_63, %c0_64, %c0_65] : memref<1x8x128xf32, #tpu.memory_space<vmem>>, vector<1x8x128xf32>
    %188 = vector.shape_cast %187 : vector<1x8x128xf32> to vector<8x128xf32>
    %189 = vector.shape_cast %186 : vector<8x128xf32> to vector<1x8x128xf32>
    tpu.vector_store %arg8[%c0_63, %c0_64, %c0_65], %189 {strides = array<i32>} : memref<1x8x128xf32, #tpu.memory_space<vmem>>, vector<1x8x128xf32>,
    %190 = vector.extract_strided_slice %185 {offsets = [8, 0], sizes = [8, 128], strides = [1, 1]} : vector<32x128xf32> to vector<8x128xf32>
    %c0_66 = arith.constant 0 : index
    %c0_67 = arith.constant 0 : index
    %c0_68 = arith.constant 0 : index
    %191 = vector.load %arg9[%c0_66, %c0_67, %c0_68] : memref<1x8x128xf32, #tpu.memory_space<vmem>>, vector<1x8x128xf32>
    %192 = vector.shape_cast %191 : vector<1x8x128xf32> to vector<8x128xf32>
    %193 = vector.shape_cast %190 : vector<8x128xf32> to vector<1x8x128xf32>
    tpu.vector_store %arg9[%c0_66, %c0_67, %c0_68], %193 {strides = array<i32>} : memref<1x8x128xf32, #tpu.memory_space<vmem>>, vector<1x8x128xf32>,
    %194 = vector.extract_strided_slice %185 {offsets = [16, 0], sizes = [8, 128], strides = [1, 1]} : vector<32x128xf32> to vector<8x128xf32>
    %c0_69 = arith.constant 0 : index
    %c0_70 = arith.constant 0 : index
    %c0_71 = arith.constant 0 : index
    %195 = vector.load %arg10[%c0_69, %c0_70, %c0_71] : memref<1x8x128xf32, #tpu.memory_space<vmem>>, vector<1x8x128xf32>
    %196 = vector.shape_cast %195 : vector<1x8x128xf32> to vector<8x128xf32>
    %197 = vector.shape_cast %194 : vector<8x128xf32> to vector<1x8x128xf32>
    tpu.vector_store %arg10[%c0_69, %c0_70, %c0_71], %197 {strides = array<i32>} : memref<1x8x128xf32, #tpu.memory_space<vmem>>, vector<1x8x128xf32>,
    %198 = vector.extract_strided_slice %185 {offsets = [24, 0], sizes = [8, 128], strides = [1, 1]} : vector<32x128xf32> to vector<8x128xf32>
    %c0_72 = arith.constant 0 : index
    %c0_73 = arith.constant 0 : index
    %c0_74 = arith.constant 0 : index
    %199 = vector.load %arg11[%c0_72, %c0_73, %c0_74] : memref<1x8x128xf32, #tpu.memory_space<vmem>>, vector<1x8x128xf32>
    %200 = vector.shape_cast %199 : vector<1x8x128xf32> to vector<8x128xf32>
    %201 = vector.shape_cast %198 : vector<8x128xf32> to vector<1x8x128xf32>
    tpu.vector_store %arg11[%c0_72, %c0_73, %c0_74], %201 {strides = array<i32>} : memref<1x8x128xf32, #tpu.memory_space<vmem>>, vector<1x8x128xf32>,
    return
  }
  func.func @transform_0(%arg0: i32) -> (i32, i32, i32) {
    %c0_i32 = arith.constant 0 : i32
    %c0_i32_0 = arith.constant 0 : i32
    %c0_i32_1 = arith.constant 0 : i32
    return %arg0, %c0_i32, %c0_i32_0 : i32, i32, i32
  }
  func.func @transform_1(%arg0: i32) -> (i32, i32) {
    %c0_i32 = arith.constant 0 : i32
    %c0_i32_0 = arith.constant 0 : i32
    %c0_i32_1 = arith.constant 0 : i32
    return %c0_i32, %c0_i32_0 : i32, i32
  }
  func.func @transform_2(%arg0: i32) -> (i32, i32) {
    %c0_i32 = arith.constant 0 : i32
    %c0_i32_0 = arith.constant 0 : i32
    %c0_i32_1 = arith.constant 0 : i32
    return %c0_i32, %c0_i32_0 : i32, i32
  }
  func.func @transform_3(%arg0: i32) -> (i32, i32) {
    %c0_i32 = arith.constant 0 : i32
    %c0_i32_0 = arith.constant 0 : i32
    %c0_i32_1 = arith.constant 0 : i32
    return %c0_i32, %c0_i32_0 : i32, i32
  }
  func.func @transform_4(%arg0: i32) -> (i32, i32) {
    %c0_i32 = arith.constant 0 : i32
    %c0_i32_0 = arith.constant 0 : i32
    %c0_i32_1 = arith.constant 0 : i32
    return %c0_i32, %c0_i32_0 : i32, i32
  }
  func.func @transform_5(%arg0: i32) -> (i32, i32) {
    %c0_i32 = arith.constant 0 : i32
    %c0_i32_0 = arith.constant 0 : i32
    %c0_i32_1 = arith.constant 0 : i32
    return %c0_i32, %c0_i32_0 : i32, i32
  }
  func.func @transform_6(%arg0: i32) -> (i32, i32, i32) {
    %c0_i32 = arith.constant 0 : i32
    %c0_i32_0 = arith.constant 0 : i32
    %c0_i32_1 = arith.constant 0 : i32
    return %arg0, %c0_i32, %c0_i32_0 : i32, i32, i32
  }
  func.func @transform_7(%arg0: i32) -> (i32, i32, i32) {
    %c0_i32 = arith.constant 0 : i32
    %c0_i32_0 = arith.constant 0 : i32
    %c0_i32_1 = arith.constant 0 : i32
    return %arg0, %c0_i32, %c0_i32_0 : i32, i32, i32
  }
  func.func @transform_8(%arg0: i32) -> (i32, i32, i32) {
    %c0_i32 = arith.constant 0 : i32
    %c0_i32_0 = arith.constant 0 : i32
    %c0_i32_1 = arith.constant 0 : i32
    return %arg0, %c0_i32, %c0_i32_0 : i32, i32, i32
  }
  func.func @transform_9(%arg0: i32) -> (i32, i32, i32) {
    %c0_i32 = arith.constant 0 : i32
    %c0_i32_0 = arith.constant 0 : i32
    %c0_i32_1 = arith.constant 0 : i32
    return %arg0, %c0_i32, %c0_i32_0 : i32, i32, i32
  }
  func.func @transform_10(%arg0: i32) -> (i32, i32, i32) {
    %c0_i32 = arith.constant 0 : i32
    %c0_i32_0 = arith.constant 0 : i32
    %c0_i32_1 = arith.constant 0 : i32
    return %arg0, %c0_i32, %c0_i32_0 : i32, i32, i32
  }
}

</mosaic_0001>

<llo_original>
// kernel: tpu_custom_call.1
$region0: #{tpu_custom_call.1}
  #allocation0 [shape = 'u32[]', space=smem, size = 0x4, offset = 0x4, fixed_abs, tag = 'smem constant byte address 0x4 - core index']
  #allocation1 [shape = 'u32[72,128]{1,0:T(1,128)}', space=vmem, size = 0x9000, scoped, tag = 'internal scratch']
  #allocation2 [shape = 'f32[8,32]{1,0:T(8,128)}', space=vmem, size = 0x1000, scoped, tag = 'scratch operand']
  %s0 = inlined_call_operand.vmem [shape: f32[2,8,32], index: 0, kind: input, shape index: {}]
  %s1 = inlined_call_operand.vmem [shape: bf16[32,96], index: 1, kind: input, shape index: {}]
  %s2 = inlined_call_operand.vmem [shape: bf16[32,32], index: 2, kind: input, shape index: {}]
  %s3 = inlined_call_operand.hbm [shape: bf16[32,128], index: 3, kind: input, shape index: {}]
  %s4 = inlined_call_operand.vmem [shape: bf16[64,32], index: 4, kind: input, shape index: {}]
  %s5 = inlined_call_operand.hbm [shape: bf16[32,128], index: 5, kind: input, shape index: {}]
  %s6 = inlined_call_operand.hbm [shape: f32[2,8,32], index: 6, kind: output, shape index: {0}]
  %s7 = inlined_call_operand.hbm [shape: f32[2,8,128], index: 7, kind: output, shape index: {1}]
  %s8 = inlined_call_operand.hbm [shape: f32[2,8,128], index: 8, kind: output, shape index: {2}]
  %s9 = inlined_call_operand.hbm [shape: f32[2,8,128], index: 9, kind: output, shape index: {3}]
  %s10 = inlined_call_operand.hbm [shape: f32[2,8,128], index: 10, kind: output, shape index: {4}]
  %11 = xla_tuple %s6, %s7, %s8, %s9, %s10
  %s12 = sld [smem:[#allocation0]]
  $region97: #{tpu_custom_call.1} parent=0
    _
  %s14 = ssub.s32 1, %s12
  %s15 = scalar_select 0, %s14, %s12
  $region1: #{tpu_custom_call.1} parent=0
    #allocation3 [shape = 'u8[8192]{0}', space=vmem, size = 0x2000, scoped, tag = 'input window, operand 3, single buffered']
    #allocation4 [shape = 's32[2]{0}', space=sflag, size = 0x8, scoped, tag = 'scoped memory for tpu_custom_call.1']
    #allocation5 [shape = 's32[2]{0}', space=sflag, size = 0x8, scoped, tag = 'scoped memory for tpu_custom_call.1']
    #allocation6 [shape = 'u8[8192]{0}', space=vmem, size = 0x2000, scoped, tag = 'input window, operand 5, single buffered']
    #allocation7 [shape = 's32[1]{0}', space=sflag, size = 0x4, scoped, tag = 'scoped memory for tpu_custom_call.1']
    #allocation8 [shape = 'u8[8192]{0}', space=vmem, size = 0x2000, scoped, tag = 'output window, operand 0']
    #allocation9 [shape = 'u8[8192]{0}', space=vmem, size = 0x2000, scoped, tag = 'output window, operand 1']
    #allocation10 [shape = 's32[2]{0}', space=sflag, size = 0x8, scoped, tag = 'scoped memory for tpu_custom_call.1']
    #allocation11 [shape = 'u8[8192]{0}', space=vmem, size = 0x2000, scoped, tag = 'output window, operand 2']
    #allocation12 [shape = 'u8[8192]{0}', space=vmem, size = 0x2000, scoped, tag = 'output window, operand 3']
    #allocation13 [shape = 's32[2]{0}', space=sflag, size = 0x8, scoped, tag = 'scoped memory for tpu_custom_call.1']
    #allocation14 [shape = 'u8[8192]{0}', space=vmem, size = 0x2000, scoped, tag = 'output window, operand 4']
    %16 = vsyncpa [#allocation4], 0
    %17 = vsyncpa [#allocation7], 0
    %18 = vsyncpa [#allocation5], 0
    %s19 = scalar_lea.sflag [#allocation5], 1
    %20 = vsyncpa %s19, 0
    %21 = vsyncpa [#allocation10], 0
    %s22 = scalar_lea.sflag [#allocation10], 1
    %23 = vsyncpa %s22, 0
    %24 = vsyncpa [#allocation13], 0
    %s25 = scalar_lea.sflag [#allocation13], 1
    %26 = vsyncpa %s25, 0
    loop: start=0, step=1, limit=4
    $region2: #{tpu_custom_call.1} parent=1 // loop_pre_header
      _
    $region3: #{tpu_custom_call.1} parent=1 // loop_header
      %s28 = sphi 0, %s32
      %p29 = scmp.ge.s32.totalorder %s28, 4
      %s38 = sphi 0, %s40
      %s41 = sphi 0, %s38
      %s42 = sphi 0, %s41
      %s58 = sphi 0, %s42
      %s62 = sphi 0, %s62
      %s64 = sphi 0, %s62
      %s65 = sphi 0, %s64
      %s79 = sphi 0, %s65
      %s83 = sphi 0, %s83
      %s85 = sphi 0, %s83
      %s86 = sphi 0, %s85
      %s100 = sphi 0, %s86
      %s104 = sphi 0, %s104
      %s106 = sphi 0, %s104
      %s107 = sphi 0, %s106
      %s121 = sphi 0, %s107
      %s125 = sphi 0, %s125
      %s127 = sphi 0, %s125
      %s128 = sphi 0, %s127
      %s142 = sphi 0, %s128
      %s146 = sphi 0, %s146
      %s148 = sphi 0, %s146
      %s149 = sphi 0, %s148
      %s163 = sphi 0, %s149
      %s169 = sphi 0, %s171
      %s172 = sphi 0, %s169
      %s173 = sphi 0, %s172
      %s189 = sphi 0, %s173
      %s195 = sphi 0, %s197
      %s198 = sphi 0, %s195
      %s199 = sphi 0, %s198
      %s215 = sphi 0, %s199
      %s221 = sphi 0, %s223
      %s224 = sphi 0, %s221
      %s225 = sphi 0, %s224
      %s241 = sphi 0, %s225
      %s247 = sphi 0, %s249
      %s250 = sphi 0, %s247
      %s251 = sphi 0, %s250
      %s267 = sphi 0, %s251
      %s273 = sphi 0, %s275
      %s276 = sphi 0, %s273
      %s277 = sphi 0, %s276
      %s293 = sphi 0, %s277
    $region4: #{tpu_custom_call.1} parent=1 // loop_header_branch
      %31 = sbr.rel (%p29) target = $region8
    $region5: #{tpu_custom_call.1} parent=1 // loop_body
      %s33 = ssub.s32 %s28, 1
      %s34 = ssub.s32 %s28, 2
      %s35 = sadd.s32 %s28, 1
      %s36 = ssub.s32 %s28, %s35
      %p37 = scmp.eq.s32.totalorder %s36, 0
      %s39 = sadd.s32 %s38, 1
      %s40 = scalar_select %p37, %s38, %s39
      %p43 = pneg %p37
      %p44 = scmp.eq.s32.totalorder %s28, 1
      %p45 = por %p43, %p44
      %p46 = scmp.ne.s32.totalorder %s38, %s41
      %p47 = scmp.eq.s32.totalorder %s28, 0
      %p48 = por %p46, %p47
      %p49 = scmp.ne.s32.totalorder %s38, %s41
      %p50 = scmp.eq.s32.totalorder %s33, 1
      %p51 = por %p49, %p50
      %p52 = scmp.ne.s32.totalorder %s41, %s42
      %p53 = scmp.eq.s32.totalorder %s33, 0
      %p54 = por %p52, %p53
      %p55 = scmp.ne.s32.totalorder %s41, %s42
      %p56 = scmp.eq.s32.totalorder %s34, 1
      %p57 = por %p55, %p56
      %p59 = scmp.ne.s32.totalorder %s42, %s58
      %p60 = scmp.eq.s32.totalorder %s34, 0
      %p61 = por %p59, %p60
      %s63 = sadd.s32 %s62, 1
      %p66 = scmp.eq.s32.totalorder %s28, 1
      %p67 = scmp.ne.s32.totalorder %s62, %s64
      %p68 = scmp.eq.s32.totalorder %s28, 0
      %p69 = por %p67, %p68
      %p70 = scmp.ne.s32.totalorder %s62, %s64
      %p71 = scmp.eq.s32.totalorder %s33, 1
      %p72 = por %p70, %p71
      %p73 = scmp.ne.s32.totalorder %s64, %s65
      %p74 = scmp.eq.s32.totalorder %s33, 0
      %p75 = por %p73, %p74
      %p76 = scmp.ne.s32.totalorder %s64, %s65
      %p77 = scmp.eq.s32.totalorder %s34, 1
      %p78 = por %p76, %p77
      %p80 = scmp.ne.s32.totalorder %s65, %s79
      %p81 = scmp.eq.s32.totalorder %s34, 0
      %p82 = por %p80, %p81
      %s84 = sadd.s32 %s83, 1
      %p87 = scmp.eq.s32.totalorder %s28, 1
      %p88 = scmp.ne.s32.totalorder %s83, %s85
      %p89 = scmp.eq.s32.totalorder %s28, 0
      %p90 = por %p88, %p89
      %p91 = scmp.ne.s32.totalorder %s83, %s85
      %p92 = scmp.eq.s32.totalorder %s33, 1
      %p93 = por %p91, %p92
      %p94 = scmp.ne.s32.totalorder %s85, %s86
      %p95 = scmp.eq.s32.totalorder %s33, 0
      %p96 = por %p94, %p95
      %p97 = scmp.ne.s32.totalorder %s85, %s86
      %p98 = scmp.eq.s32.totalorder %s34, 1
      %p99 = por %p97, %p98
      %p101 = scmp.ne.s32.totalorder %s86, %s100
      %p102 = scmp.eq.s32.totalorder %s34, 0
      %p103 = por %p101, %p102
      %s105 = sadd.s32 %s104, 1
      %p108 = scmp.eq.s32.totalorder %s28, 1
      %p109 = scmp.ne.s32.totalorder %s104, %s106
      %p110 = scmp.eq.s32.totalorder %s28, 0
      %p111 = por %p109, %p110
      %p112 = scmp.ne.s32.totalorder %s104, %s106
      %p113 = scmp.eq.s32.totalorder %s33, 1
      %p114 = por %p112, %p113
      %p115 = scmp.ne.s32.totalorder %s106, %s107
      %p116 = scmp.eq.s32.totalorder %s33, 0
      %p117 = por %p115, %p116
      %p118 = scmp.ne.s32.totalorder %s106, %s107
      %p119 = scmp.eq.s32.totalorder %s34, 1
      %p120 = por %p118, %p119
      %p122 = scmp.ne.s32.totalorder %s107, %s121
      %p123 = scmp.eq.s32.totalorder %s34, 0
      %p124 = por %p122, %p123
      %s126 = sadd.s32 %s125, 1
      %p129 = scmp.eq.s32.totalorder %s28, 1
      %p130 = scmp.ne.s32.totalorder %s125, %s127
      %p131 = scmp.eq.s32.totalorder %s28, 0
      %p132 = por %p130, %p131
      %p133 = scmp.ne.s32.totalorder %s125, %s127
      %p134 = scmp.eq.s32.totalorder %s33, 1
      %p135 = por %p133, %p134
      %p136 = scmp.ne.s32.totalorder %s127, %s128
      %p137 = scmp.eq.s32.totalorder %s33, 0
      %p138 = por %p136, %p137
      %p139 = scmp.ne.s32.totalorder %s127, %s128
      %p140 = scmp.eq.s32.totalorder %s34, 1
      %p141 = por %p139, %p140
      %p143 = scmp.ne.s32.totalorder %s128, %s142
      %p144 = scmp.eq.s32.totalorder %s34, 0
      %p145 = por %p143, %p144
      %s147 = sadd.s32 %s146, 1
      %p150 = scmp.eq.s32.totalorder %s28, 1
      %p151 = scmp.ne.s32.totalorder %s146, %s148
      %p152 = scmp.eq.s32.totalorder %s28, 0
      %p153 = por %p151, %p152
      %p154 = scmp.ne.s32.totalorder %s146, %s148
      %p155 = scmp.eq.s32.totalorder %s33, 1
      %p156 = por %p154, %p155
      %p157 = scmp.ne.s32.totalorder %s148, %s149
      %p158 = scmp.eq.s32.totalorder %s33, 0
      %p159 = por %p157, %p158
      %p160 = scmp.ne.s32.totalorder %s148, %s149
      %p161 = scmp.eq.s32.totalorder %s34, 1
      %p162 = por %p160, %p161
      %p164 = scmp.ne.s32.totalorder %s149, %s163
      %p165 = scmp.eq.s32.totalorder %s34, 0
      %p166 = por %p164, %p165
      %s167 = ssub.s32 %s28, %s35
      %p168 = scmp.eq.s32.totalorder %s167, 0
      %s170 = sadd.s32 %s169, 1
      %s171 = scalar_select %p168, %s169, %s170
      %p174 = pneg %p168
      %p175 = scmp.eq.s32.totalorder %s28, 1
      %p176 = por %p174, %p175
      %p177 = scmp.ne.s32.totalorder %s169, %s172
      %p178 = scmp.eq.s32.totalorder %s28, 0
      %p179 = por %p177, %p178
      %p180 = scmp.ne.s32.totalorder %s169, %s172
      %p181 = scmp.eq.s32.totalorder %s33, 1
      %p182 = por %p180, %p181
      %p183 = scmp.ne.s32.totalorder %s172, %s173
      %p184 = scmp.eq.s32.totalorder %s33, 0
      %p185 = por %p183, %p184
      %p186 = scmp.ne.s32.totalorder %s172, %s173
      %p187 = scmp.eq.s32.totalorder %s34, 1
      %p188 = por %p186, %p187
      %p190 = scmp.ne.s32.totalorder %s173, %s189
      %p191 = scmp.eq.s32.totalorder %s34, 0
      %p192 = por %p190, %p191
      %s193 = ssub.s32 %s28, %s35
      %p194 = scmp.eq.s32.totalorder %s193, 0
      %s196 = sadd.s32 %s195, 1
      %s197 = scalar_select %p194, %s195, %s196
      %p200 = pneg %p194
      %p201 = scmp.eq.s32.totalorder %s28, 1
      %p202 = por %p200, %p201
      %p203 = scmp.ne.s32.totalorder %s195, %s198
      %p204 = scmp.eq.s32.totalorder %s28, 0
      %p205 = por %p203, %p204
      %p206 = scmp.ne.s32.totalorder %s195, %s198
      %p207 = scmp.eq.s32.totalorder %s33, 1
      %p208 = por %p206, %p207
      %p209 = scmp.ne.s32.totalorder %s198, %s199
      %p210 = scmp.eq.s32.totalorder %s33, 0
      %p211 = por %p209, %p210
      %p212 = scmp.ne.s32.totalorder %s198, %s199
      %p213 = scmp.eq.s32.totalorder %s34, 1
      %p214 = por %p212, %p213
      %p216 = scmp.ne.s32.totalorder %s199, %s215
      %p217 = scmp.eq.s32.totalorder %s34, 0
      %p218 = por %p216, %p217
      %s219 = ssub.s32 %s28, %s35
      %p220 = scmp.eq.s32.totalorder %s219, 0
      %s222 = sadd.s32 %s221, 1
      %s223 = scalar_select %p220, %s221, %s222
      %p226 = pneg %p220
      %p227 = scmp.eq.s32.totalorder %s28, 1
      %p228 = por %p226, %p227
      %p229 = scmp.ne.s32.totalorder %s221, %s224
      %p230 = scmp.eq.s32.totalorder %s28, 0
      %p231 = por %p229, %p230
      %p232 = scmp.ne.s32.totalorder %s221, %s224
      %p233 = scmp.eq.s32.totalorder %s33, 1
      %p234 = por %p232, %p233
      %p235 = scmp.ne.s32.totalorder %s224, %s225
      %p236 = scmp.eq.s32.totalorder %s33, 0
      %p237 = por %p235, %p236
      %p238 = scmp.ne.s32.totalorder %s224, %s225
      %p239 = scmp.eq.s32.totalorder %s34, 1
      %p240 = por %p238, %p239
      %p242 = scmp.ne.s32.totalorder %s225, %s241
      %p243 = scmp.eq.s32.totalorder %s34, 0
      %p244 = por %p242, %p243
      %s245 = ssub.s32 %s28, %s35
      %p246 = scmp.eq.s32.totalorder %s245, 0
      %s248 = sadd.s32 %s247, 1
      %s249 = scalar_select %p246, %s247, %s248
      %p252 = pneg %p246
      %p253 = scmp.eq.s32.totalorder %s28, 1
      %p254 = por %p252, %p253
      %p255 = scmp.ne.s32.totalorder %s247, %s250
      %p256 = scmp.eq.s32.totalorder %s28, 0
      %p257 = por %p255, %p256
      %p258 = scmp.ne.s32.totalorder %s247, %s250
      %p259 = scmp.eq.s32.totalorder %s33, 1
      %p260 = por %p258, %p259
      %p261 = scmp.ne.s32.totalorder %s250, %s251
      %p262 = scmp.eq.s32.totalorder %s33, 0
      %p263 = por %p261, %p262
      %p264 = scmp.ne.s32.totalorder %s250, %s251
      %p265 = scmp.eq.s32.totalorder %s34, 1
      %p266 = por %p264, %p265
      %p268 = scmp.ne.s32.totalorder %s251, %s267
      %p269 = scmp.eq.s32.totalorder %s34, 0
      %p270 = por %p268, %p269
      %s271 = ssub.s32 %s28, %s35
      %p272 = scmp.eq.s32.totalorder %s271, 0
      %s274 = sadd.s32 %s273, 1
      %s275 = scalar_select %p272, %s273, %s274
      %p278 = pneg %p272
      %p279 = scmp.eq.s32.totalorder %s28, 1
      %p280 = por %p278, %p279
      %p281 = scmp.ne.s32.totalorder %s273, %s276
      %p282 = scmp.eq.s32.totalorder %s28, 0
      %p283 = por %p281, %p282
      %p284 = scmp.ne.s32.totalorder %s273, %s276
      %p285 = scmp.eq.s32.totalorder %s33, 1
      %p286 = por %p284, %p285
      %p287 = scmp.ne.s32.totalorder %s276, %s277
      %p288 = scmp.eq.s32.totalorder %s33, 0
      %p289 = por %p287, %p288
      %p290 = scmp.ne.s32.totalorder %s276, %s277
      %p291 = scmp.eq.s32.totalorder %s34, 1
      %p292 = por %p290, %p291
      %p294 = scmp.ne.s32.totalorder %s277, %s293
      %p295 = scmp.eq.s32.totalorder %s34, 0
      %p296 = por %p294, %p295
      %p297 = scmp.le.s32.totalorder 1, %s28
      %p298 = scmp.lt.s32.totalorder %s28, 3
      %p299 = pnand %p297, %p298
      %p300 = pneg %p299
      // Predicated region
      $region9: #{tpu_custom_call.1} parent=5 // pred_check
        _
      $region10: #{tpu_custom_call.1} parent=5 // pred_check_branch
        %302 = sbr.rel (%p299) target = $region12
      $region11: #{tpu_custom_call.1} parent=5 // pred_region
        %s303 = ssub.s32 %s28, 1
        // Predicated region
        $region13: #{tpu_custom_call.1} parent=11 // pred_check
          %p304 = pneg %p75
        $region14: #{tpu_custom_call.1} parent=11 // pred_check_branch
          %306 = sbr.rel (%p304) target = $region16
        $region15: #{tpu_custom_call.1} parent=11 // pred_region
          _
        $region16: #{tpu_custom_call.1} parent=11 // pred_fallthru
          _
        // Predicated region
        $region17: #{tpu_custom_call.1} parent=11 // pred_check
          %p307 = pneg %p96
        $region18: #{tpu_custom_call.1} parent=11 // pred_check_branch
          %309 = sbr.rel (%p307) target = $region20
        $region19: #{tpu_custom_call.1} parent=11 // pred_region
          _
        $region20: #{tpu_custom_call.1} parent=11 // pred_fallthru
          _
        // Predicated region
        $region21: #{tpu_custom_call.1} parent=11 // pred_check
          %p310 = pneg %p117
        $region22: #{tpu_custom_call.1} parent=11 // pred_check_branch
          %312 = sbr.rel (%p310) target = $region24
        $region23: #{tpu_custom_call.1} parent=11 // pred_region
          %314 = vsyncadd [#allocation4], 0
          %s315 = sshll.u32 %s3, 4
          %s316 = int_to_ptr.hbm [resolvable:$true] %s315
          %s317 = sshll.u32 [#allocation3], 4
          %s318 = int_to_ptr.vmem [resolvable:$true] %s317
          %323 = dma.hbm_to_vmem [thread:$0]  %s316, 256, %s318, [#allocation4], 64, 64, 4
        $region24: #{tpu_custom_call.1} parent=11 // pred_fallthru
          _
        // Predicated region
        $region25: #{tpu_custom_call.1} parent=11 // pred_check
          %p324 = pneg %p138
        $region26: #{tpu_custom_call.1} parent=11 // pred_check_branch
          %326 = sbr.rel (%p324) target = $region28
        $region27: #{tpu_custom_call.1} parent=11 // pred_region
          _
        $region28: #{tpu_custom_call.1} parent=11 // pred_fallthru
          _
        // Predicated region
        $region29: #{tpu_custom_call.1} parent=11 // pred_check
          %p327 = pneg %p159
        $region30: #{tpu_custom_call.1} parent=11 // pred_check_branch
          %329 = sbr.rel (%p327) target = $region32
        $region31: #{tpu_custom_call.1} parent=11 // pred_region
          %331 = vsyncadd [#allocation7], 0
          %s332 = sshll.u32 %s5, 4
          %s333 = int_to_ptr.hbm [resolvable:$true] %s332
          %s334 = sshll.u32 [#allocation6], 4
          %s335 = int_to_ptr.vmem [resolvable:$true] %s334
          %340 = dma.hbm_to_vmem [thread:$0]  %s333, 256, %s335, [#allocation7], 64, 64, 4
        $region32: #{tpu_custom_call.1} parent=11 // pred_fallthru
          _
      $region12: #{tpu_custom_call.1} parent=5 // pred_fallthru
        _
      %p341 = scmp.lt.s32.totalorder %s28, 2
      // Predicated region
      $region33: #{tpu_custom_call.1} parent=5 // pred_check
        %p342 = pneg %p341
      $region34: #{tpu_custom_call.1} parent=5 // pred_check_branch
        %344 = sbr.rel (%p342) target = $region36
      $region35: #{tpu_custom_call.1} parent=5 // pred_region
        // Predicated region
        $region37: #{tpu_custom_call.1} parent=35 // pred_check
          %p345 = pneg %p48
        $region38: #{tpu_custom_call.1} parent=35 // pred_check_branch
          %347 = sbr.rel (%p345) target = $region40
        $region39: #{tpu_custom_call.1} parent=35 // pred_region
          %p348 = scmp.lt.s32.totalorder %s28, 1
          %s349 = scalar_select %p348, %s28, 1
          %s350 = smul.addr %s349, 8
          %s351 = scalar_lea.vmem %s0, %s350
        $region40: #{tpu_custom_call.1} parent=35 // pred_fallthru
          _
      $region36: #{tpu_custom_call.1} parent=5 // pred_fallthru
        _
      %p352 = scmp.le.s32.totalorder 1, %s28
      %p353 = scmp.lt.s32.totalorder %s28, 3
      %p354 = pnand %p352, %p353
      %p355 = pneg %p354
      // Predicated region
      $region41: #{tpu_custom_call.1} parent=5 // pred_check
        _
      $region42: #{tpu_custom_call.1} parent=5 // pred_check_branch
        %357 = sbr.rel (%p354) target = $region44
      $region43: #{tpu_custom_call.1} parent=5 // pred_region
        %s358 = ssub.s32 %s28, 1
        // Predicated region
        $region45: #{tpu_custom_call.1} parent=43 // pred_check
          %p359 = pneg %p117
        $region46: #{tpu_custom_call.1} parent=43 // pred_check_branch
          %361 = sbr.rel (%p359) target = $region48
        $region47: #{tpu_custom_call.1} parent=43 // pred_region
          %363 = dma.done [#allocation4], 256
        $region48: #{tpu_custom_call.1} parent=43 // pred_fallthru
          _
        // Predicated region
        $region49: #{tpu_custom_call.1} parent=43 // pred_check
          %p364 = pneg %p159
        $region50: #{tpu_custom_call.1} parent=43 // pred_check_branch
          %366 = sbr.rel (%p364) target = $region52
        $region51: #{tpu_custom_call.1} parent=43 // pred_region
          %368 = dma.done [#allocation7], 256
        $region52: #{tpu_custom_call.1} parent=43 // pred_fallthru
          _
        %p369 = scmp.lt.s32.totalorder %s33, 1
        %s370 = scalar_select %p369, %s33, 1
        %s371 = smul.addr %s370, 8
        %s372 = scalar_lea.vmem %s0, %s371
        %p373 = pneg %p54
        %p374 = pneg %p51
        %p375 = pneg %p75
        %p376 = pneg %p72
        %p377 = pneg %p96
        %p378 = pneg %p93
        %p379 = pneg %p117
        %p380 = pneg %p114
        %p381 = pneg %p138
        %p382 = pneg %p135
        %p383 = pneg %p159
        %p384 = pneg %p156
        %p385 = pneg %p185
        %p386 = pneg %p182
        %s387 = sand.u32 %s172, 1
        %s388 = scalar_lea.sflag [#allocation5], %s387
        %s389 = sand.u32 %s172, 1
        %s390 = smul.addr %s389, 8
        %s391 = scalar_lea.vmem [#allocation8], %s390
        %p392 = pneg %p211
        %p393 = pneg %p208
        %s394 = sand.u32 %s33, 1
        %s395 = scalar_lea.sflag [#allocation10], %s394
        %s396 = sand.u32 %s198, 1
        %s397 = smul.addr %s396, 8
        %s398 = scalar_lea.vmem [#allocation9], %s397
        %p399 = pneg %p237
        %p400 = pneg %p234
        %s401 = sand.u32 %s33, 1
        %s402 = scalar_lea.sflag [#allocation10], %s401
        %s403 = sand.u32 %s224, 1
        %s404 = smul.addr %s403, 8
        %s405 = scalar_lea.vmem [#allocation11], %s404
        %p406 = pneg %p263
        %p407 = pneg %p260
        %s408 = sand.u32 %s33, 1
        %s409 = scalar_lea.sflag [#allocation13], %s408
        %s410 = sand.u32 %s250, 1
        %s411 = smul.addr %s410, 8
        %s412 = scalar_lea.vmem [#allocation12], %s411
        %p413 = pneg %p289
        %p414 = pneg %p286
        %s415 = sand.u32 %s33, 1
        %s416 = scalar_lea.sflag [#allocation13], %s415
        %s417 = sand.u32 %s276, 1
        %s418 = smul.addr %s417, 8
        %s419 = scalar_lea.vmem [#allocation14], %s418
        %p420 = scmp.lt.s32.totalorder %s33, 1
        %s421 = scalar_select %p420, %s33, 1
        %s422 = smul.addr %s421, 8
        %s423 = scalar_lea.vmem %s0, %s422
        %v425 = vld [vmem:[%s423] sm:$0xff]
        %v426 = vmul.f32 %v425, %v425
        %vm427 = vcmask 261120
        %v428 = vsel %vm427, %v426, 0.0
        %429 = vadd.xlane.f32.xlu0 %v428
        %v430 = vpop.xlane.xlu0 %429
        %v431 = vrcp.pop 32.0
        %v432 = vmul.f32 32.0, %v431
        %v433 = vsub.f32 1.0, %v432
        %v434 = vmul.f32 %v431, %v433
        %v435 = vadd.f32 %v431, %v434
        %vm436 = vweird.f32 %v431
        %v437 = vsel %vm436, %v431, %v435
        %v438 = vmul.f32 %v430, %v437
        %v439 = vadd.f32 %v438, 1e-05
        %v440 = vrsqrt.pop %v439
        %v441 = vmul.f32 %v440, %v439
        %v442 = vmul.f32 %v441, %v440
        %v443 = vmul.f32 0.5, %v442
        %v444 = vsub.f32 1.5, %v443
        %v445 = vmul.f32 %v440, %v444
        %vm446 = vweird.f32 %v439
        %vm447 = vweird.f32 %v440
        %vm448 = vmor %vm446, %vm447
        %v449 = vsel %vm448, %v440, %v445
        %v450 = vmul.f32 %v425, %v449
        %v451 = vpack.c.bf16 %v450, %v450
        %v452 = vld [vmem:[%s1] sm:$0xf]
        %v453 = vld [vmem:[%s1 + $0x4] sm:$0xf]
        %v454 = vld [vmem:[%s1 + $0x8] sm:$0xf]
        %v455 = vld [vmem:[%s1 + $0xc] sm:$0xf]
        %v460 = vunpack.c.l.b16 %v452
        %v461 = vunpack.c.l.b16 %v453
        %v462 = vunpack.c.l.b16 %v454
        %v463 = vunpack.c.l.b16 %v455
        %v464 = vpack.c.b16 %v461, %v460
        %v465 = vpack.c.b16 %v463, %v462
        %v469 = vsel %vm427, %v451, 0
        %471 = vmatpush.bf16.msra.mxu0 0
        %472 = vmatpush.bf16.msra.mxu0 0
        %473 = vmatpush.bf16.msra.mxu0 0
        %474 = vmatpush.bf16.msra.mxu0 0
        %475 = vmatpush.bf16.msra.mxu0 0
        %476 = vmatpush.bf16.msra.mxu0 0
        %477 = vmatpush.bf16.msra.mxu0 %v465
        %478 = vmatpush.bf16.msra.mxu0 %v464
        %479 = vmatmul.bf16.gmra.mxu0 %v469
        %v480 = vpop.f32.mrf.mxu0
        %v481 = vadd.f32 0.0, %v480
        %v482 = vpop.f32.mrf.mxu0
        %483 = vdwg.mxu0
        %v484 = vlaneseq
        %v485 = vshrl.u32 %v484, 7
        %v486 = vlaneseq
        %v487 = vand.u32 %v486, 127
        %vm488 = vcmp.ge.s32.totalorder %v485, %v487
        %v489 = vsel %vm488, 0.0, -1e+30
        %v490 = vpack.c.bf16 %v481, %v481
        %492 = vrot.lane.b32.xlu0 %v490, 96
        %v493 = vpop.permute.xlu0 %492
        %vm494 = vcmask 64512
        %v496 = vsel %vm494, %v490, 0
        %v499 = vsel %vm494, %v493, 0
        %501 = vmatpush.bf16.xpose.msra.mxu0 0
        %502 = vmatpush.bf16.xpose.msra.mxu0 0
        %503 = vmatpush.bf16.xpose.msra.mxu0 0
        %504 = vmatpush.bf16.xpose.msra.mxu0 0
        %505 = vmatpush.bf16.xpose.msra.mxu0 0
        %506 = vmatpush.bf16.xpose.msra.mxu0 0
        %507 = vmatpush.bf16.xpose.msra.mxu0 0
        %508 = vmatpush.bf16.xpose.msra.mxu0 %v499
        %509 = vmatmul.bf16.gmra.mxu0 %v496
        %v510 = vpop.f32.mrf.mxu0
        %v511 = vadd.f32 %v489, %v510
        %v512 = vpop.f32.mrf.mxu0
        %513 = vdwg.mxu0
        %v514 = vsel %vm494, %v511, -inf
        %515 = vmax.xlane.f32.xlu0 %v514
        %v516 = vpop.xlane.xlu0 %515
        %v517 = vsub.f32 %v511, %v516
        %v518 = vmul.f32 %v517, 1.442695
        %v519 = vpow.pop %v518
        %v520 = vsel %vm494, %v519, 0.0
        %521 = vadd.xlane.f32.xlu0 %v520
        %v522 = vpop.xlane.xlu0 %521
        %v523 = vrcp.pop %v522
        %v524 = vmul.f32 %v519, %v523
        %v525 = vpack.c.bf16 %v524, %v524
        %526 = vrot.lane.b32.xlu0 %v490, 64
        %v527 = vpop.permute.xlu0 %526
        %v529 = vsel %vm494, %v525, 0
        %vm531 = vcmask 1043456
        %v533 = vsel %vm531, %v527, 0
        %535 = vmatpush.bf16.msra.mxu0 0
        %536 = vmatpush.bf16.msra.mxu0 0
        %537 = vmatpush.bf16.msra.mxu0 0
        %538 = vmatpush.bf16.msra.mxu0 0
        %539 = vmatpush.bf16.msra.mxu0 0
        %540 = vmatpush.bf16.msra.mxu0 0
        %541 = vmatpush.bf16.msra.mxu0 0
        %542 = vmatpush.bf16.msra.mxu0 %v533
        %543 = vmatmul.bf16.gmra.mxu0 %v529
        %v544 = vpop.f32.mrf.mxu0
        %v545 = vadd.f32 0.0, %v544
        %v546 = vpop.f32.mrf.mxu0
        %547 = vdwg.mxu0
        %548 = vst.msk [vmem:[#allocation2] sm:$0xff] %vm494, %v545
        %549 = vrot.lane.b32.xlu0 %v490, 120
        %v550 = vpop.permute.xlu0 %549
        %551 = vrot.lane.b32.xlu0 %v490, 88
        %v552 = vpop.permute.xlu0 %551
        %v554 = vsel %vm494, %v550, 0
        %v557 = vsel %vm494, %v552, 0
        %559 = vmatpush.bf16.xpose.msra.mxu0 0
        %560 = vmatpush.bf16.xpose.msra.mxu0 0
        %561 = vmatpush.bf16.xpose.msra.mxu0 0
        %562 = vmatpush.bf16.xpose.msra.mxu0 0
        %563 = vmatpush.bf16.xpose.msra.mxu0 0
        %564 = vmatpush.bf16.xpose.msra.mxu0 0
        %565 = vmatpush.bf16.xpose.msra.mxu0 0
        %566 = vmatpush.bf16.xpose.msra.mxu0 %v557
        %567 = vmatmul.bf16.gmra.mxu0 %v554
        %v568 = vpop.f32.mrf.mxu0
        %v569 = vadd.f32 %v489, %v568
        %v570 = vpop.f32.mrf.mxu0
        %571 = vdwg.mxu0
        %v572 = vsel %vm494, %v569, -inf
        %573 = vmax.xlane.f32.xlu0 %v572
        %v574 = vpop.xlane.xlu0 %573
        %v575 = vsub.f32 %v569, %v574
        %v576 = vmul.f32 %v575, 1.442695
        %v577 = vpow.pop %v576
        %v578 = vsel %vm494, %v577, 0.0
        %579 = vadd.xlane.f32.xlu0 %v578
        %v580 = vpop.xlane.xlu0 %579
        %v581 = vrcp.pop %v580
        %v582 = vmul.f32 %v577, %v581
        %v583 = vpack.c.bf16 %v582, %v582
        %584 = vrot.lane.b32.xlu0 %v490, 56
        %v585 = vpop.permute.xlu0 %584
        %v587 = vsel %vm494, %v583, 0
        %v590 = vsel %vm531, %v585, 0
        %592 = vmatpush.bf16.msra.mxu0 0
        %593 = vmatpush.bf16.msra.mxu0 0
        %594 = vmatpush.bf16.msra.mxu0 0
        %595 = vmatpush.bf16.msra.mxu0 0
        %596 = vmatpush.bf16.msra.mxu0 0
        %597 = vmatpush.bf16.msra.mxu0 0
        %598 = vmatpush.bf16.msra.mxu0 0
        %599 = vmatpush.bf16.msra.mxu0 %v590
        %600 = vmatmul.bf16.gmra.mxu0 %v587
        %v601 = vpop.f32.mrf.mxu0
        %v602 = vadd.f32 0.0, %v601
        %v603 = vpop.f32.mrf.mxu0
        %604 = vdwg.mxu0
        %606 = vrot.lane.b32.xlu0 %v602, 8
        %v607 = vpop.permute.xlu0 %606
        %vm609 = vcmask 130112
        %610 = vst.msk [vmem:[#allocation2] sm:$0xff] %vm609, %v607
        %611 = vrot.lane.b32.xlu0 %v490, 112
        %v612 = vpop.permute.xlu0 %611
        %613 = vrot.lane.b32.xlu0 %v490, 80
        %v614 = vpop.permute.xlu0 %613
        %v616 = vsel %vm494, %v612, 0
        %v619 = vsel %vm494, %v614, 0
        %621 = vmatpush.bf16.xpose.msra.mxu0 0
        %622 = vmatpush.bf16.xpose.msra.mxu0 0
        %623 = vmatpush.bf16.xpose.msra.mxu0 0
        %624 = vmatpush.bf16.xpose.msra.mxu0 0
        %625 = vmatpush.bf16.xpose.msra.mxu0 0
        %626 = vmatpush.bf16.xpose.msra.mxu0 0
        %627 = vmatpush.bf16.xpose.msra.mxu0 0
        %628 = vmatpush.bf16.xpose.msra.mxu0 %v619
        %629 = vmatmul.bf16.gmra.mxu0 %v616
        %v630 = vpop.f32.mrf.mxu0
        %v631 = vadd.f32 %v489, %v630
        %v632 = vpop.f32.mrf.mxu0
        %633 = vdwg.mxu0
        %v634 = vsel %vm494, %v631, -inf
        %635 = vmax.xlane.f32.xlu0 %v634
        %v636 = vpop.xlane.xlu0 %635
        %v637 = vsub.f32 %v631, %v636
        %v638 = vmul.f32 %v637, 1.442695
        %v639 = vpow.pop %v638
        %v640 = vsel %vm494, %v639, 0.0
        %641 = vadd.xlane.f32.xlu0 %v640
        %v642 = vpop.xlane.xlu0 %641
        %v643 = vrcp.pop %v642
        %v644 = vmul.f32 %v639, %v643
        %v645 = vpack.c.bf16 %v644, %v644
        %646 = vrot.lane.b32.xlu0 %v490, 48
        %v647 = vpop.permute.xlu0 %646
        %v649 = vsel %vm494, %v645, 0
        %v652 = vsel %vm531, %v647, 0
        %654 = vmatpush.bf16.msra.mxu0 0
        %655 = vmatpush.bf16.msra.mxu0 0
        %656 = vmatpush.bf16.msra.mxu0 0
        %657 = vmatpush.bf16.msra.mxu0 0
        %658 = vmatpush.bf16.msra.mxu0 0
        %659 = vmatpush.bf16.msra.mxu0 0
        %660 = vmatpush.bf16.msra.mxu0 0
        %661 = vmatpush.bf16.msra.mxu0 %v652
        %662 = vmatmul.bf16.gmra.mxu0 %v649
        %v663 = vpop.f32.mrf.mxu0
        %v664 = vadd.f32 0.0, %v663
        %v665 = vpop.f32.mrf.mxu0
        %666 = vdwg.mxu0
        %668 = vrot.lane.b32.xlu0 %v664, 16
        %v669 = vpop.permute.xlu0 %668
        %vm671 = vcmask 195712
        %672 = vst.msk [vmem:[#allocation2] sm:$0xff] %vm671, %v669
        %673 = vrot.lane.b32.xlu0 %v490, 104
        %v674 = vpop.permute.xlu0 %673
        %675 = vrot.lane.b32.xlu0 %v490, 72
        %v676 = vpop.permute.xlu0 %675
        %v678 = vsel %vm494, %v674, 0
        %v681 = vsel %vm494, %v676, 0
        %683 = vmatpush.bf16.xpose.msra.mxu0 0
        %684 = vmatpush.bf16.xpose.msra.mxu0 0
        %685 = vmatpush.bf16.xpose.msra.mxu0 0
        %686 = vmatpush.bf16.xpose.msra.mxu0 0
        %687 = vmatpush.bf16.xpose.msra.mxu0 0
        %688 = vmatpush.bf16.xpose.msra.mxu0 0
        %689 = vmatpush.bf16.xpose.msra.mxu0 0
        %690 = vmatpush.bf16.xpose.msra.mxu0 %v681
        %691 = vmatmul.bf16.gmra.mxu0 %v678
        %v692 = vpop.f32.mrf.mxu0
        %v693 = vadd.f32 %v489, %v692
        %v694 = vpop.f32.mrf.mxu0
        %695 = vdwg.mxu0
        %v696 = vsel %vm494, %v693, -inf
        %697 = vmax.xlane.f32.xlu0 %v696
        %v698 = vpop.xlane.xlu0 %697
        %v699 = vsub.f32 %v693, %v698
        %v700 = vmul.f32 %v699, 1.442695
        %v701 = vpow.pop %v700
        %v702 = vsel %vm494, %v701, 0.0
        %703 = vadd.xlane.f32.xlu0 %v702
        %v704 = vpop.xlane.xlu0 %703
        %v705 = vrcp.pop %v704
        %v706 = vmul.f32 %v701, %v705
        %v707 = vpack.c.bf16 %v706, %v706
        %708 = vrot.lane.b32.xlu0 %v490, 40
        %v709 = vpop.permute.xlu0 %708
        %v711 = vsel %vm494, %v707, 0
        %v714 = vsel %vm531, %v709, 0
        %716 = vmatpush.bf16.msra.mxu0 0
        %717 = vmatpush.bf16.msra.mxu0 0
        %718 = vmatpush.bf16.msra.mxu0 0
        %719 = vmatpush.bf16.msra.mxu0 0
        %720 = vmatpush.bf16.msra.mxu0 0
        %721 = vmatpush.bf16.msra.mxu0 0
        %722 = vmatpush.bf16.msra.mxu0 0
        %723 = vmatpush.bf16.msra.mxu0 %v714
        %724 = vmatmul.bf16.gmra.mxu0 %v711
        %v725 = vpop.f32.mrf.mxu0
        %v726 = vadd.f32 0.0, %v725
        %v727 = vpop.f32.mrf.mxu0
        %728 = vdwg.mxu0
        %730 = vrot.lane.b32.xlu0 %v726, 24
        %v731 = vpop.permute.xlu0 %730
        %vm733 = vcmask 261312
        %734 = vst.msk [vmem:[#allocation2] sm:$0xff] %vm733, %v731
        %v735 = vld [vmem:[#allocation2] sm:$0xff]
        %v736 = vpack.c.bf16 %v735, %v735
        %v737 = vld [vmem:[%s2] sm:$0xf]
        %v738 = vld [vmem:[%s2 + $0x4] sm:$0xf]
        %v739 = vld [vmem:[%s2 + $0x8] sm:$0xf]
        %v740 = vld [vmem:[%s2 + $0xc] sm:$0xf]
        %v745 = vunpack.c.l.b16 %v737
        %v746 = vunpack.c.l.b16 %v738
        %v747 = vunpack.c.l.b16 %v739
        %v748 = vunpack.c.l.b16 %v740
        %v749 = vpack.c.b16 %v746, %v745
        %v750 = vpack.c.b16 %v748, %v747
        %v754 = vsel %vm427, %v736, 0
        %756 = vmatpush.bf16.msra.mxu0 0
        %757 = vmatpush.bf16.msra.mxu0 0
        %758 = vmatpush.bf16.msra.mxu0 0
        %759 = vmatpush.bf16.msra.mxu0 0
        %760 = vmatpush.bf16.msra.mxu0 0
        %761 = vmatpush.bf16.msra.mxu0 0
        %762 = vmatpush.bf16.msra.mxu0 %v750
        %763 = vmatpush.bf16.msra.mxu0 %v749
        %764 = vmatmul.bf16.gmra.mxu0 %v754
        %v765 = vpop.f32.mrf.mxu0
        %v766 = vadd.f32 0.0, %v765
        %v767 = vpop.f32.mrf.mxu0
        %768 = vdwg.mxu0
        %v769 = vadd.f32 %v766, %v425
        %v770 = vmul.f32 %v769, %v769
        %v771 = vsel %vm427, %v770, 0.0
        %772 = vadd.xlane.f32.xlu0 %v771
        %v773 = vpop.xlane.xlu0 %772
        %v774 = vmul.f32 %v773, %v437
        %v775 = vadd.f32 %v774, 1e-05
        %v776 = vrsqrt.pop %v775
        %v777 = vmul.f32 %v776, %v775
        %v778 = vmul.f32 %v777, %v776
        %v779 = vmul.f32 0.5, %v778
        %v780 = vsub.f32 1.5, %v779
        %v781 = vmul.f32 %v776, %v780
        %vm782 = vweird.f32 %v775
        %vm783 = vweird.f32 %v776
        %vm784 = vmor %vm782, %vm783
        %v785 = vsel %vm784, %v776, %v781
        %v786 = vmul.f32 %v769, %v785
        %v787 = vpack.c.bf16 %v786, %v786
        %v788 = vld [vmem:[#allocation3] sm:$0xf]
        %v789 = vld [vmem:[#allocation3 + $0x4] sm:$0xf]
        %v790 = vld [vmem:[#allocation3 + $0x8] sm:$0xf]
        %v791 = vld [vmem:[#allocation3 + $0xc] sm:$0xf]
        %v796 = vunpack.c.l.b16 %v788
        %v797 = vunpack.c.l.b16 %v789
        %v798 = vunpack.c.l.b16 %v790
        %v799 = vunpack.c.l.b16 %v791
        %v800 = vpack.c.b16 %v797, %v796
        %v801 = vpack.c.b16 %v799, %v798
        %v805 = vsel %vm427, %v787, 0
        %807 = vmatpush.bf16.msra.mxu0 0
        %808 = vmatpush.bf16.msra.mxu0 0
        %809 = vmatpush.bf16.msra.mxu0 0
        %810 = vmatpush.bf16.msra.mxu0 0
        %811 = vmatpush.bf16.msra.mxu0 0
        %812 = vmatpush.bf16.msra.mxu0 0
        %813 = vmatpush.bf16.msra.mxu0 %v801
        %814 = vmatpush.bf16.msra.mxu0 %v800
        %815 = vmatmul.bf16.gmra.mxu0 %v805
        %v816 = vpop.f32.mrf.mxu0
        %v817 = vadd.f32 0.0, %v816
        %v818 = vpop.f32.mrf.mxu0
        %819 = vdwg.mxu0
        %v820 = vxor.u32 %v817, 2147483648
        %v821 = vmul.f32 %v820, 1.442695
        %v822 = vpow.pop %v821
        %v823 = vadd.f32 %v822, 1.0
        %v824 = vrcp.pop %v823
        %v825 = vmul.f32 %v823, %v824
        %v826 = vsub.f32 1.0, %v825
        %v827 = vmul.f32 %v824, %v826
        %v828 = vadd.f32 %v824, %v827
        %vm829 = vweird.f32 %v823
        %vm830 = vweird.f32 %v824
        %vm831 = vmor %vm829, %vm830
        %v832 = vsel %vm831, %v824, %v828
        %v833 = vand.u32 2147483647, %v823
        %vm834 = vcmp.eq.f32.partialorder %v833, 8.507059e+37
        %v835 = vand.u32 %v823, 2147483648
        %v836 = vor.u32 1.1754944e-38, %v835
        %v837 = vsel %vm834, %v836, %v832
        %v838 = vmul.f32 1.0, %v837
        %v839 = vmul.f32 %v817, %v838
        %841 = vrot.lane.b32.xlu0 %v817, 64
        %v842 = vpop.permute.xlu0 %841
        %v844 = vmul.f32 %v839, %v842
        %v845 = vpack.c.bf16 %v844, %v844
        %v846 = vld [vmem:[%s4] sm:$0xf]
        %v847 = vld [vmem:[%s4 + $0x4] sm:$0xf]
        %v848 = vld [vmem:[%s4 + $0x8] sm:$0xf]
        %v849 = vld [vmem:[%s4 + $0xc] sm:$0xf]
        %v850 = vld [vmem:[%s4 + $0x10] sm:$0xf]
        %v851 = vld [vmem:[%s4 + $0x14] sm:$0xf]
        %v852 = vld [vmem:[%s4 + $0x18] sm:$0xf]
        %v853 = vld [vmem:[%s4 + $0x1c] sm:$0xf]
        %v862 = vunpack.c.l.b16 %v846
        %v863 = vunpack.c.l.b16 %v847
        %v864 = vunpack.c.l.b16 %v848
        %v865 = vunpack.c.l.b16 %v849
        %v866 = vunpack.c.l.b16 %v850
        %v867 = vunpack.c.l.b16 %v851
        %v868 = vunpack.c.l.b16 %v852
        %v869 = vunpack.c.l.b16 %v853
        %v870 = vpack.c.b16 %v863, %v862
        %v871 = vpack.c.b16 %v865, %v864
        %v872 = vpack.c.b16 %v867, %v866
        %v873 = vpack.c.b16 %v869, %v868
        %vm878 = vcmask 523264
        %v880 = vsel %vm878, %v845, 0
        %882 = vmatpush.bf16.msra.mxu0 0
        %883 = vmatpush.bf16.msra.mxu0 0
        %884 = vmatpush.bf16.msra.mxu0 0
        %885 = vmatpush.bf16.msra.mxu0 0
        %886 = vmatpush.bf16.msra.mxu0 %v873
        %887 = vmatpush.bf16.msra.mxu0 %v872
        %888 = vmatpush.bf16.msra.mxu0 %v871
        %889 = vmatpush.bf16.msra.mxu0 %v870
        %890 = vmatmul.bf16.gmra.mxu0 %v880
        %v891 = vpop.f32.mrf.mxu0
        %v892 = vadd.f32 0.0, %v891
        %v893 = vpop.f32.mrf.mxu0
        %894 = vdwg.mxu0
        %v895 = vadd.f32 %v769, %v892
        %896 = vst.msk [vmem:[%s391] sm:$0xff] %vm427, %v895
        %v897 = vmul.f32 %v895, %v895
        %v898 = vsel %vm427, %v897, 0.0
        %899 = vadd.xlane.f32.xlu0 %v898
        %v900 = vpop.xlane.xlu0 %899
        %v901 = vmul.f32 %v900, %v437
        %v902 = vadd.f32 %v901, 1e-05
        %v903 = vrsqrt.pop %v902
        %v904 = vmul.f32 %v903, %v902
        %v905 = vmul.f32 %v904, %v903
        %v906 = vmul.f32 0.5, %v905
        %v907 = vsub.f32 1.5, %v906
        %v908 = vmul.f32 %v903, %v907
        %vm909 = vweird.f32 %v902
        %vm910 = vweird.f32 %v903
        %vm911 = vmor %vm909, %vm910
        %v912 = vsel %vm911, %v903, %v908
        %v913 = vmul.f32 %v895, %v912
        %v914 = vmul.f32 %v766, %v766
        %v915 = vsel %vm427, %v914, 0.0
        %916 = vadd.xlane.f32.xlu0 %v915
        %v917 = vpop.xlane.xlu0 %916
        %v918 = vmul.f32 %v917, %v437
        %v919 = vadd.f32 %v918, 1e-05
        %v920 = vrsqrt.pop %v919
        %v921 = vmul.f32 %v920, %v919
        %v922 = vmul.f32 %v921, %v920
        %v923 = vmul.f32 0.5, %v922
        %v924 = vsub.f32 1.5, %v923
        %v925 = vmul.f32 %v920, %v924
        %vm926 = vweird.f32 %v919
        %vm927 = vweird.f32 %v920
        %vm928 = vmor %vm926, %vm927
        %v929 = vsel %vm928, %v920, %v925
        %v930 = vmul.f32 %v766, %v929
        %v931 = vmul.f32 %v892, %v892
        %v932 = vsel %vm427, %v931, 0.0
        %933 = vadd.xlane.f32.xlu0 %v932
        %v934 = vpop.xlane.xlu0 %933
        %v935 = vmul.f32 %v934, %v437
        %v936 = vadd.f32 %v935, 1e-05
        %v937 = vrsqrt.pop %v936
        %v938 = vmul.f32 %v937, %v936
        %v939 = vmul.f32 %v938, %v937
        %v940 = vmul.f32 0.5, %v939
        %v941 = vsub.f32 1.5, %v940
        %v942 = vmul.f32 %v937, %v941
        %vm943 = vweird.f32 %v936
        %vm944 = vweird.f32 %v937
        %vm945 = vmor %vm943, %vm944
        %v946 = vsel %vm945, %v937, %v942
        %v947 = vmul.f32 %v892, %v946
        %v948 = vpack.c.bf16 %v930, %v913
        %v949 = vpack.c.bf16 %v947, %v786
        %v950 = vld [vmem:[#allocation6] sm:$0xf]
        %v951 = vld [vmem:[#allocation6 + $0x4] sm:$0xf]
        %v952 = vld [vmem:[#allocation6 + $0x8] sm:$0xf]
        %v953 = vld [vmem:[#allocation6 + $0xc] sm:$0xf]
        %v958 = vunpack.c.l.b16 %v950
        %v959 = vunpack.c.l.b16 %v951
        %v960 = vunpack.c.l.b16 %v952
        %v961 = vunpack.c.l.b16 %v953
        %v962 = vpack.c.b16 %v959, %v958
        %v963 = vpack.c.b16 %v961, %v960
        %v967 = vsel %vm427, %v948, 0
        %v970 = vsel %vm427, %v949, 0
        %972 = vmatpush.bf16.msra.mxu0 0
        %973 = vmatpush.bf16.msra.mxu0 0
        %974 = vmatpush.bf16.msra.mxu0 0
        %975 = vmatpush.bf16.msra.mxu0 0
        %976 = vmatpush.bf16.msra.mxu0 0
        %977 = vmatpush.bf16.msra.mxu0 0
        %978 = vmatpush.bf16.msra.mxu0 %v963
        %979 = vmatpush.bf16.msra.mxu0 %v962
        %980 = vmatmul.bf16.gmra.mxu0 %v967
        %v981 = vpop.f32.mrf.mxu0
        %v982 = vadd.f32 0.0, %v981
        %v983 = vpop.f32.mrf.mxu0
        %v984 = vadd.f32 0.0, %v983
        %985 = vmatmul.bf16.gmra.mxu0 %v970
        %v986 = vpop.f32.mrf.mxu0
        %v987 = vadd.f32 0.0, %v986
        %v988 = vpop.f32.mrf.mxu0
        %v989 = vadd.f32 0.0, %v988
        %990 = vdwg.mxu0
        %991 = vst [vmem:[%s398] sm:$0xff] %v982
        %992 = vst [vmem:[%s405] sm:$0xff] %v984
        %993 = vst [vmem:[%s412] sm:$0xff] %v987
        %994 = vst [vmem:[%s419] sm:$0xff] %v989
        %s995 = sand.u32 %s172, 1
        %s996 = scalar_lea.sflag [#allocation5], %s995
        %s997 = sand.u32 %s172, 1
        %s998 = smul.addr %s997, 8
        %s999 = scalar_lea.vmem [#allocation8], %s998
        %s1000 = sand.u32 %s33, 1
        %s1001 = scalar_lea.sflag [#allocation10], %s1000
        %s1002 = sand.u32 %s198, 1
        %s1003 = smul.addr %s1002, 8
        %s1004 = scalar_lea.vmem [#allocation9], %s1003
        %s1005 = sand.u32 %s33, 1
        %s1006 = scalar_lea.sflag [#allocation10], %s1005
        %s1007 = sand.u32 %s224, 1
        %s1008 = smul.addr %s1007, 8
        %s1009 = scalar_lea.vmem [#allocation11], %s1008
        %s1010 = sand.u32 %s33, 1
        %s1011 = scalar_lea.sflag [#allocation13], %s1010
        %s1012 = sand.u32 %s250, 1
        %s1013 = smul.addr %s1012, 8
        %s1014 = scalar_lea.vmem [#allocation12], %s1013
        %s1015 = sand.u32 %s33, 1
        %s1016 = scalar_lea.sflag [#allocation13], %s1015
        %s1017 = sand.u32 %s276, 1
        %s1018 = smul.addr %s1017, 8
        %s1019 = scalar_lea.vmem [#allocation14], %s1018
        // Predicated region
        $region53: #{tpu_custom_call.1} parent=43 // pred_check
          %p1020 = pneg %p182
        $region54: #{tpu_custom_call.1} parent=43 // pred_check_branch
          %1022 = sbr.rel (%p1020) target = $region56
        $region55: #{tpu_custom_call.1} parent=43 // pred_region
          %1024 = vsyncadd %s996, 0
          %s1025 = smul.addr %s33, 8
          %s1026 = scalar_lea.hbm %s6, %s1025
          %s1028 = sshll.u32 %s999, 4
          %s1029 = int_to_ptr.vmem [resolvable:$true] %s1028
          %s1030 = sshll.u32 %s1026, 4
          %s1031 = int_to_ptr.hbm [resolvable:$true] %s1030
          %1033 = dma.vmem_to_hbm [thread:$0]  %s1029, 128, %s1031, %s996
        $region56: #{tpu_custom_call.1} parent=43 // pred_fallthru
          _
        // Predicated region
        $region57: #{tpu_custom_call.1} parent=43 // pred_check
          %p1034 = pneg %p208
        $region58: #{tpu_custom_call.1} parent=43 // pred_check_branch
          %1036 = sbr.rel (%p1034) target = $region60
        $region59: #{tpu_custom_call.1} parent=43 // pred_region
          %1038 = vsyncadd %s1001, 0
          %s1039 = smul.addr %s33, 8
          %s1040 = scalar_lea.hbm %s7, %s1039
          %s1042 = sshll.u32 %s1004, 4
          %s1043 = int_to_ptr.vmem [resolvable:$true] %s1042
          %s1044 = sshll.u32 %s1040, 4
          %s1045 = int_to_ptr.hbm [resolvable:$true] %s1044
          %1047 = dma.vmem_to_hbm [thread:$0]  %s1043, 128, %s1045, %s1001
        $region60: #{tpu_custom_call.1} parent=43 // pred_fallthru
          _
        // Predicated region
        $region61: #{tpu_custom_call.1} parent=43 // pred_check
          %p1048 = pneg %p234
        $region62: #{tpu_custom_call.1} parent=43 // pred_check_branch
          %1050 = sbr.rel (%p1048) target = $region64
        $region63: #{tpu_custom_call.1} parent=43 // pred_region
          %1052 = vsyncadd %s1006, 0
          %s1053 = smul.addr %s33, 8
          %s1054 = scalar_lea.hbm %s8, %s1053
          %s1056 = sshll.u32 %s1009, 4
          %s1057 = int_to_ptr.vmem [resolvable:$true] %s1056
          %s1058 = sshll.u32 %s1054, 4
          %s1059 = int_to_ptr.hbm [resolvable:$true] %s1058
          %1061 = dma.vmem_to_hbm [thread:$0]  %s1057, 128, %s1059, %s1006
        $region64: #{tpu_custom_call.1} parent=43 // pred_fallthru
          _
        // Predicated region
        $region65: #{tpu_custom_call.1} parent=43 // pred_check
          %p1062 = pneg %p260
        $region66: #{tpu_custom_call.1} parent=43 // pred_check_branch
          %1064 = sbr.rel (%p1062) target = $region68
        $region67: #{tpu_custom_call.1} parent=43 // pred_region
          %1066 = vsyncadd %s1011, 0
          %s1067 = smul.addr %s33, 8
          %s1068 = scalar_lea.hbm %s9, %s1067
          %s1070 = sshll.u32 %s1014, 4
          %s1071 = int_to_ptr.vmem [resolvable:$true] %s1070
          %s1072 = sshll.u32 %s1068, 4
          %s1073 = int_to_ptr.hbm [resolvable:$true] %s1072
          %1075 = dma.vmem_to_hbm [thread:$0]  %s1071, 128, %s1073, %s1011
        $region68: #{tpu_custom_call.1} parent=43 // pred_fallthru
          _
        // Predicated region
        $region69: #{tpu_custom_call.1} parent=43 // pred_check
          %p1076 = pneg %p286
        $region70: #{tpu_custom_call.1} parent=43 // pred_check_branch
          %1078 = sbr.rel (%p1076) target = $region72
        $region71: #{tpu_custom_call.1} parent=43 // pred_region
          %1080 = vsyncadd %s1016, 0
          %s1081 = smul.addr %s33, 8
          %s1082 = scalar_lea.hbm %s10, %s1081
          %s1084 = sshll.u32 %s1019, 4
          %s1085 = int_to_ptr.vmem [resolvable:$true] %s1084
          %s1086 = sshll.u32 %s1082, 4
          %s1087 = int_to_ptr.hbm [resolvable:$true] %s1086
          %1089 = dma.vmem_to_hbm [thread:$0]  %s1085, 128, %s1087, %s1016
        $region72: #{tpu_custom_call.1} parent=43 // pred_fallthru
          _
      $region44: #{tpu_custom_call.1} parent=5 // pred_fallthru
        _
      %p1090 = scmp.le.s32.totalorder 2, %s28
      // Predicated region
      $region73: #{tpu_custom_call.1} parent=5 // pred_check
        %p1091 = pneg %p1090
      $region74: #{tpu_custom_call.1} parent=5 // pred_check_branch
        %1093 = sbr.rel (%p1091) target = $region76
      $region75: #{tpu_custom_call.1} parent=5 // pred_region
        %s1094 = ssub.s32 %s28, 2
        // Predicated region
        $region77: #{tpu_custom_call.1} parent=75 // pred_check
          %p1095 = pneg %p188
        $region78: #{tpu_custom_call.1} parent=75 // pred_check_branch
          %1097 = sbr.rel (%p1095) target = $region80
        $region79: #{tpu_custom_call.1} parent=75 // pred_region
          %s1098 = sand.u32 %s173, 1
          %s1099 = scalar_lea.sflag [#allocation5], %s1098
          %s1100 = sand.u32 %s173, 1
          %s1101 = smul.addr %s1100, 8
          %s1102 = scalar_lea.vmem [#allocation8], %s1101
          %1104 = dma.done %s1099, 128
        $region80: #{tpu_custom_call.1} parent=75 // pred_fallthru
          _
        // Predicated region
        $region81: #{tpu_custom_call.1} parent=75 // pred_check
          %p1105 = pneg %p214
        $region82: #{tpu_custom_call.1} parent=75 // pred_check_branch
          %1107 = sbr.rel (%p1105) target = $region84
        $region83: #{tpu_custom_call.1} parent=75 // pred_region
          %s1108 = sand.u32 %s34, 1
          %s1109 = scalar_lea.sflag [#allocation10], %s1108
          %s1110 = sand.u32 %s199, 1
          %s1111 = smul.addr %s1110, 8
          %s1112 = scalar_lea.vmem [#allocation9], %s1111
          %1114 = dma.done %s1109, 128
        $region84: #{tpu_custom_call.1} parent=75 // pred_fallthru
          _
        // Predicated region
        $region85: #{tpu_custom_call.1} parent=75 // pred_check
          %p1115 = pneg %p240
        $region86: #{tpu_custom_call.1} parent=75 // pred_check_branch
          %1117 = sbr.rel (%p1115) target = $region88
        $region87: #{tpu_custom_call.1} parent=75 // pred_region
          %s1118 = sand.u32 %s34, 1
          %s1119 = scalar_lea.sflag [#allocation10], %s1118
          %s1120 = sand.u32 %s225, 1
          %s1121 = smul.addr %s1120, 8
          %s1122 = scalar_lea.vmem [#allocation11], %s1121
          %1124 = dma.done %s1119, 128
        $region88: #{tpu_custom_call.1} parent=75 // pred_fallthru
          _
        // Predicated region
        $region89: #{tpu_custom_call.1} parent=75 // pred_check
          %p1125 = pneg %p266
        $region90: #{tpu_custom_call.1} parent=75 // pred_check_branch
          %1127 = sbr.rel (%p1125) target = $region92
        $region91: #{tpu_custom_call.1} parent=75 // pred_region
          %s1128 = sand.u32 %s34, 1
          %s1129 = scalar_lea.sflag [#allocation13], %s1128
          %s1130 = sand.u32 %s251, 1
          %s1131 = smul.addr %s1130, 8
          %s1132 = scalar_lea.vmem [#allocation12], %s1131
          %1134 = dma.done %s1129, 128
        $region92: #{tpu_custom_call.1} parent=75 // pred_fallthru
          _
        // Predicated region
        $region93: #{tpu_custom_call.1} parent=75 // pred_check
          %p1135 = pneg %p292
        $region94: #{tpu_custom_call.1} parent=75 // pred_check_branch
          %1137 = sbr.rel (%p1135) target = $region96
        $region95: #{tpu_custom_call.1} parent=75 // pred_region
          %s1138 = sand.u32 %s34, 1
          %s1139 = scalar_lea.sflag [#allocation13], %s1138
          %s1140 = sand.u32 %s277, 1
          %s1141 = smul.addr %s1140, 8
          %s1142 = scalar_lea.vmem [#allocation14], %s1141
          %1144 = dma.done %s1139, 128
        $region96: #{tpu_custom_call.1} parent=75 // pred_fallthru
          _
      $region76: #{tpu_custom_call.1} parent=5 // pred_fallthru
        _
    $region6: #{tpu_custom_call.1} parent=1 // loop_footer
      %s32 = sadd.s32 1, %s28
    $region7: #{tpu_custom_call.1} parent=1 // loop_footer_branch
      %27 = sbr.rel target = $region3
    $region8: #{tpu_custom_call.1} parent=1 // loop_exit
      _
    %1145 = vsyncpa [#allocation4], 1
    %s1146 = scalar_lea.sflag [#allocation4], 1
    %1147 = vsyncpa %s1146, 1
    %1148 = vsyncpa [#allocation7], 1
    %1149 = vsyncpa [#allocation5], 1
    %s1150 = scalar_lea.sflag [#allocation5], 1
    %1151 = vsyncpa %s1150, 1
    %1152 = vsyncpa [#allocation10], 1
    %s1153 = scalar_lea.sflag [#allocation10], 1
    %1154 = vsyncpa %s1153, 1
    %1155 = vsyncpa [#allocation13], 1
    %s1156 = scalar_lea.sflag [#allocation13], 1
    %1157 = vsyncpa %s1156, 1

</llo_original>
